<compile_context>
chip_gen: v6e
topology: v6e:2x2x1
jax: 0.10.0
libtpu: 0.0.40
codegen_flags: <defaults>
</compile_context>

<pallas_src>
import jax
import jax.numpy as jnp
from jax import lax
from jax.experimental import pallas as pl
from jax.experimental.pallas import tpu as pltpu


def _pick_batch_block(N):
    """Batch elements per grid step.  Bigger blocks amortize per-step overhead;
    keep the grid length >= 2 so the "parallel" batch axis can still be sharded
    across TensorCores (v7x megacore)."""
    for nb in (8, 4, 2):
        if N % nb == 0 and N // nb >= 2:
            return nb
    return 1


def _make_block_kernel(H, W, C, padc, NB):
    HW = H * W
    # flat-index shift of tap (dy, dx): neighbour (dy-1, dx-1) of each pixel.
    shifts = [((dy - 1) * W + (dx - 1), dx) for dy in range(3) for dx in range(3)]

    def kernel(x_ref, m_ref, w1_ref, s1_ref, b1_ref, w2_ref, s2_ref, b2_ref,
               o_ref, buf_ref):
        # x_ref : (NB, C, HW)       f32   NB batch elements (NCHW, flattened HW)
        # m_ref : (2, HW)           bf16  edge-column masks (xo != 0, xo != W-1)
        # w*_ref: (C, 9C)           bf16  W^T with the 9 taps flattened into K
        # s*,b* : (C, 1)            f32   folded BN scale / shift (incl. conv bias)
        # o_ref : (NB, C, HW)       f32
        # buf   : (C, HW + 2*padc)  bf16  zero-tailed staging buffer (VMEM scratch)
        m_first = m_ref[0:1, :]            # (1, HW) bf16: 0 where xo == 0
        m_last = m_ref[1:2, :]             # (1, HW) bf16: 0 where xo == W-1

        # Re-zero only the tiny halo tails once per grid step (cheap), and do it
        # unconditionally so it stays correct when the "parallel" batch axis is
        # sharded across TensorCores (v7x megacore).
        zeros_tail = jnp.zeros((C, padc), jnp.bfloat16)
        buf_ref[:, :padc] = zeros_tail
        buf_ref[:, padc + HW:] = zeros_tail

        def conv_bn_relu(a_bf16, w_ref, s_ref, b_ref):
            # Stage activation into the buffer interior; tails stay zero, so
            # out-of-range rows read as zero padding automatically.
            buf_ref[:, padc:padc + HW] = a_bf16
            a_pad = buf_ref[...]                                  # (C, HW+2*padc)
            pieces = []
            for s, dx in shifts:
                sl = a_pad[:, padc + s:padc + s + HW]             # (C, HW) lane shift
                if dx == 0:       # neighbour column xo-1: invalid at xo == 0
                    sl = sl * m_first
                elif dx == 2:     # neighbour column xo+1: invalid at xo == W-1
                    sl = sl * m_last
                pieces.append(sl)
            im2col = jnp.concatenate(pieces, axis=0)              # (9C, HW) bf16
            acc = jnp.dot(w_ref[...], im2col,
                          preferred_element_type=jnp.float32)     # (C, HW) f32
            # folded BN + ReLU, f32 epilogue, lane-dense
            return jnp.maximum(acc * s_ref[...] + b_ref[...], 0.0)

        # Statically unrolled loop over the NB batch elements of this block.
        for b in range(NB):
            x = x_ref[b]                                          # (C, HW) f32
            y1 = conv_bn_relu(x.astype(jnp.bfloat16), w1_ref, s1_ref, b1_ref)
            y2 = conv_bn_relu(y1.astype(jnp.bfloat16), w2_ref, s2_ref, b2_ref)
            # Residual add; DropPath(p=0.0) is the identity.
            # TODO(synk): stochastic DropPath (p>0, training mode) not implemented.
            o_ref[b] = (x + y2).astype(o_ref.dtype)

    return kernel


@jax.jit
def block_forward(x_nchw, w1, s1, b1, w2, s2, b2):
    """Forward pass of `Block` (eval-mode BN folded into scale/shift).

    x_nchw : (N, C, H, W) f32
    w1, w2 : (3, 3, C, C) f32  conv kernels in HWIO layout
    s*, b* : (C,)         f32  folded BN scale / shift (incl. conv bias)
    """
    N, C, H, W = x_nchw.shape
    HW = H * W
    padc = pl.cdiv(W + 1, 32) * 32          # halo tail width per side (>= W+1)
    NB = _pick_batch_block(N)               # batch elements per grid step

    x_flat = x_nchw.reshape(N, C, HW)       # free reshape: NCHW consumed as-is

    def prep_w(w):                          # (3,3,Cin,Cout) -> (Cout, 9*Cin) bf16
        return jnp.transpose(w.reshape(9 * C, C)).astype(jnp.bfloat16)

    w1t, w2t = prep_w(w1), prep_w(w2)
    s1c, b1c = s1.reshape(C, 1), b1.reshape(C, 1)
    s2c, b2c = s2.reshape(C, 1), b2.reshape(C, 1)

    # Edge-column validity masks (depend only on xo = p % W), built once here.
    col = jnp.arange(HW, dtype=jnp.int32) % W
    edge_masks = jnp.stack([col != 0, col != W - 1]).astype(jnp.bfloat16)  # (2, HW)

    kernel = _make_block_kernel(H, W, C, padc, NB)
    rep = lambda n: (0, 0)                  # grid-invariant (replicated) blocks
    out = pl.pallas_call(
        kernel,
        out_shape=jax.ShapeDtypeStruct((N, C, HW), x_nchw.dtype),
        grid_spec=pltpu.PrefetchScalarGridSpec(
            num_scalar_prefetch=0,
            grid=(N // NB,),
            in_specs=[
                pl.BlockSpec((NB, C, HW), lambda n: (n, 0, 0)),  # x, lane-dense
                pl.BlockSpec((2, HW), rep),                      # edge masks
                pl.BlockSpec((C, 9 * C), rep),                   # W1^T (bf16)
                pl.BlockSpec((C, 1), rep),                       # scale1
                pl.BlockSpec((C, 1), rep),                       # shift1
                pl.BlockSpec((C, 9 * C), rep),                   # W2^T (bf16)
                pl.BlockSpec((C, 1), rep),                       # scale2
                pl.BlockSpec((C, 1), rep),                       # shift2
            ],
            out_specs=pl.BlockSpec((NB, C, HW), lambda n: (n, 0, 0)),
            scratch_shapes=[pltpu.VMEM((C, HW + 2 * padc), jnp.bfloat16)],
        ),
        compiler_params=pltpu.CompilerParams(
            dimension_semantics=("parallel",)),
    )(x_flat, edge_masks, w1t, s1c, b1c, w2t, s2c, b2c)

    return out.reshape(N, C, H, W)          # free reshape back to NCHW


def _fold_bn(conv_bias, gamma, beta, mean, var, eps=1e-5):
    scale = gamma / jnp.sqrt(var + eps)
    shift = beta - mean * scale + conv_bias * scale
    return scale, shift


def _reference(x_nchw, w1, cb1, bn1, w2, cb2, bn2, eps=1e-5,
               conv_dtype=jnp.float32):
    """Pure-JAX reference (eval-mode BN).  conv_dtype=bfloat16 mirrors the
    kernel's mixed-precision MXU inputs (f32 accumulation either way)."""
    def conv_bn_relu(h, w_hwio, cb, bn):
        g, be, m, v = bn
        y = lax.conv_general_dilated(
            h.astype(conv_dtype), w_hwio.astype(conv_dtype), (1, 1), 'SAME',
            dimension_numbers=('NCHW', 'HWIO', 'NCHW'),
            preferred_element_type=jnp.float32)
        y = y + cb[None, :, None, None]
        y = (g[None, :, None, None] * (y - m[None, :, None, None])
             / jnp.sqrt(v[None, :, None, None] + eps) + be[None, :, None, None])
        return jnp.maximum(y, 0.0)

    y = conv_bn_relu(x_nchw, w1, cb1, bn1)
    y = conv_bn_relu(y, w2, cb2, bn2)
    return x_nchw + y


def _run_case(N, C, H, W, seed, params):
    (w1, cb1, bn1, s1, b1, w2, cb2, bn2, s2, b2) = params
    x = jax.random.normal(jax.random.PRNGKey(seed), (N, C, H, W), jnp.float32)

    out = jax.block_until_ready(block_forward(x, w1, s1, b1, w2, s2, b2))
    assert out.shape == (N, C, H, W)

    # Primary check: same mixed precision as the kernel (bf16 conv inputs,
    # f32 accumulation and epilogue).
    ref_bf16 = jax.block_until_ready(
        _reference(x, w1, cb1, bn1, w2, cb2, bn2, conv_dtype=jnp.bfloat16))
    assert jnp.allclose(out, ref_bf16, atol=2e-2, rtol=2e-2), \
        f"N={N}: max err vs bf16 ref {jnp.max(jnp.abs(out - ref_bf16))}"

    # Loose sanity check against the all-f32 reference (bf16 MXU rounding).
    ref_f32 = jax.block_until_ready(_reference(x, w1, cb1, bn1, w2, cb2, bn2))
    assert jnp.allclose(out, ref_f32, atol=0.5, rtol=0.5), \
        f"N={N}: max err vs f32 ref {jnp.max(jnp.abs(out - ref_f32))}"


if __name__ == "__main__":
    # Block(dim=32) applied to NCHW inputs of spatial size 16x16.
    C, H, W = 32, 16, 16
    key = jax.random.PRNGKey(0)
    ks = jax.random.split(key, 13)

    # Conv weights in (kh, kw, Cin, Cout) == HWIO layout.
    w1 = jax.random.normal(ks[1], (3, 3, C, C), jnp.float32) * 0.1
    cb1 = jax.random.normal(ks[2], (C,), jnp.float32) * 0.1
    w2 = jax.random.normal(ks[3], (3, 3, C, C), jnp.float32) * 0.1
    cb2 = jax.random.normal(ks[4], (C,), jnp.float32) * 0.1

    # BatchNorm (eval mode) params / running stats.
    g1 = 1.0 + 0.1 * jax.random.normal(ks[5], (C,), jnp.float32)
    be1 = 0.1 * jax.random.normal(ks[6], (C,), jnp.float32)
    m1 = 0.1 * jax.random.normal(ks[7], (C,), jnp.float32)
    v1 = 1.0 + 0.1 * jnp.abs(jax.random.normal(ks[8], (C,), jnp.float32))
    g2 = 1.0 + 0.1 * jax.random.normal(ks[9], (C,), jnp.float32)
    be2 = 0.1 * jax.random.normal(ks[10], (C,), jnp.float32)
    m2 = 0.1 * jax.random.normal(ks[11], (C,), jnp.float32)
    v2 = 1.0 + 0.1 * jnp.abs(jax.random.normal(ks[12], (C,), jnp.float32))

    s1, b1 = _fold_bn(cb1, g1, be1, m1, v1)
    s2, b2 = _fold_bn(cb2, g2, be2, m2, v2)

    params = (w1, cb1, (g1, be1, m1, v1), s1, b1,
              w2, cb2, (g2, be2, m2, v2), s2, b2)

    # N=2 -> one batch element per grid step (grid=(2,), megacore-parallel).
    _run_case(2, C, H, W, seed=0, params=params)
    # N=4 -> batch-blocked path: 2 elements per grid step (grid=(2,)).
    _run_case(4, C, H, W, seed=1, params=params)

    print("KERNEL_OK")
</pallas_src>

<mosaic_0001>
module attributes {stable_mosaic.version = 11 : i64} {
  func.func @kernel(%arg0: i32, %arg1: memref<1x32x256xf32, #tpu.memory_space<vmem>>, %arg2: memref<2x256xbf16, #tpu.memory_space<vmem>>, %arg3: memref<32x288xbf16, #tpu.memory_space<vmem>>, %arg4: memref<32x1xf32, #tpu.memory_space<vmem>>, %arg5: memref<32x1xf32, #tpu.memory_space<vmem>>, %arg6: memref<32x288xbf16, #tpu.memory_space<vmem>>, %arg7: memref<32x1xf32, #tpu.memory_space<vmem>>, %arg8: memref<32x1xf32, #tpu.memory_space<vmem>>, %arg9: memref<1x32x256xf32, #tpu.memory_space<vmem>>, %arg10: memref<32x320xbf16, #tpu.memory_space<vmem>>) attributes {dimension_semantics = [#tpu.dimension_semantics<parallel>], iteration_bounds = array<i64: 2>, scalar_prefetch = 0 : i64, scratch_operands = 1 : i64, tpu.core_type = #tpu.core_type<tc>, window_params = [{transform_indices = @transform_0, window_bounds = array<i64: 1, 32, 256>}, {pipeline_mode = #tpu.pipeline_mode<synchronous>, transform_indices = @transform_1, window_bounds = array<i64: 2, 256>}, {pipeline_mode = #tpu.pipeline_mode<synchronous>, transform_indices = @transform_2, window_bounds = array<i64: 32, 288>}, {pipeline_mode = #tpu.pipeline_mode<synchronous>, transform_indices = @transform_3, window_bounds = array<i64: 32, 1>}, {pipeline_mode = #tpu.pipeline_mode<synchronous>, transform_indices = @transform_4, window_bounds = array<i64: 32, 1>}, {pipeline_mode = #tpu.pipeline_mode<synchronous>, transform_indices = @transform_5, window_bounds = array<i64: 32, 288>}, {pipeline_mode = #tpu.pipeline_mode<synchronous>, transform_indices = @transform_6, window_bounds = array<i64: 32, 1>}, {pipeline_mode = #tpu.pipeline_mode<synchronous>, transform_indices = @transform_7, window_bounds = array<i64: 32, 1>}, {transform_indices = @transform_8, window_bounds = array<i64: 1, 32, 256>}]} {
    %c0 = arith.constant 0 : index
    %c0_0 = arith.constant 0 : index
    %0 = vector.load %arg2[%c0, %c0_0] : memref<2x256xbf16, #tpu.memory_space<vmem>>, vector<1x256xbf16>
    %c1 = arith.constant 1 : index
    %c0_1 = arith.constant 0 : index
    %1 = vector.load %arg2[%c1, %c0_1] : memref<2x256xbf16, #tpu.memory_space<vmem>>, vector<1x256xbf16>
    %cst = arith.constant 0.000000e+00 : bf16
    %2 = vector.broadcast %cst : bf16 to vector<32x32xbf16>
    %c0_2 = arith.constant 0 : index
    %c0_3 = arith.constant 0 : index
    %3 = vector.load %arg10[%c0_2, %c0_3] : memref<32x320xbf16, #tpu.memory_space<vmem>>, vector<32x32xbf16>
    tpu.vector_store %arg10[%c0_2, %c0_3], %2 {strides = array<i32>} : memref<32x320xbf16, #tpu.memory_space<vmem>>, vector<32x32xbf16>,
    %c0_4 = arith.constant 0 : index
    %c288 = arith.constant 288 : index
    %4 = vector.load %arg10[%c0_4, %c288] : memref<32x320xbf16, #tpu.memory_space<vmem>>, vector<32x32xbf16>
    tpu.vector_store %arg10[%c0_4, %c288], %2 {strides = array<i32>} : memref<32x320xbf16, #tpu.memory_space<vmem>>, vector<32x32xbf16>,
    %c0_5 = arith.constant 0 : index
    %c0_6 = arith.constant 0 : index
    %c0_7 = arith.constant 0 : index
    %5 = vector.load %arg1[%c0_5, %c0_6, %c0_7] : memref<1x32x256xf32, #tpu.memory_space<vmem>>, vector<1x32x256xf32>
    %6 = vector.shape_cast %5 : vector<1x32x256xf32> to vector<32x256xf32>
    %7 = arith.truncf %6 : vector<32x256xf32> to vector<32x256xbf16>
    %c0_8 = arith.constant 0 : index
    %c32 = arith.constant 32 : index
    %8 = vector.load %arg10[%c0_8, %c32] : memref<32x320xbf16, #tpu.memory_space<vmem>>, vector<32x256xbf16>
    tpu.vector_store %arg10[%c0_8, %c32], %7 {strides = array<i32>} : memref<32x320xbf16, #tpu.memory_space<vmem>>, vector<32x256xbf16>,
    %c0_9 = arith.constant 0 : index
    %c0_10 = arith.constant 0 : index
    %9 = vector.load %arg10[%c0_9, %c0_10] : memref<32x320xbf16, #tpu.memory_space<vmem>>, vector<32x320xbf16>
    %10 = vector.extract_strided_slice %9 {offsets = [0, 15], sizes = [32, 256], strides = [1, 1]} : vector<32x320xbf16> to vector<32x256xbf16>
    %11 = vector.broadcast %0 : vector<1x256xbf16> to vector<32x256xbf16>
    %12 = arith.mulf %10, %11 : vector<32x256xbf16>
    %13 = vector.extract_strided_slice %9 {offsets = [0, 16], sizes = [32, 256], strides = [1, 1]} : vector<32x320xbf16> to vector<32x256xbf16>
    %14 = vector.extract_strided_slice %9 {offsets = [0, 17], sizes = [32, 256], strides = [1, 1]} : vector<32x320xbf16> to vector<32x256xbf16>
    %15 = vector.broadcast %1 : vector<1x256xbf16> to vector<32x256xbf16>
    %16 = arith.mulf %14, %15 : vector<32x256xbf16>
    %17 = vector.extract_strided_slice %9 {offsets = [0, 31], sizes = [32, 256], strides = [1, 1]} : vector<32x320xbf16> to vector<32x256xbf16>
    %18 = vector.broadcast %0 : vector<1x256xbf16> to vector<32x256xbf16>
    %19 = arith.mulf %17, %18 : vector<32x256xbf16>
    %20 = vector.extract_strided_slice %9 {offsets = [0, 32], sizes = [32, 256], strides = [1, 1]} : vector<32x320xbf16> to vector<32x256xbf16>
    %21 = vector.extract_strided_slice %9 {offsets = [0, 33], sizes = [32, 256], strides = [1, 1]} : vector<32x320xbf16> to vector<32x256xbf16>
    %22 = vector.broadcast %1 : vector<1x256xbf16> to vector<32x256xbf16>
    %23 = arith.mulf %21, %22 : vector<32x256xbf16>
    %24 = vector.extract_strided_slice %9 {offsets = [0, 47], sizes = [32, 256], strides = [1, 1]} : vector<32x320xbf16> to vector<32x256xbf16>
    %25 = vector.broadcast %0 : vector<1x256xbf16> to vector<32x256xbf16>
    %26 = arith.mulf %24, %25 : vector<32x256xbf16>
    %27 = vector.extract_strided_slice %9 {offsets = [0, 48], sizes = [32, 256], strides = [1, 1]} : vector<32x320xbf16> to vector<32x256xbf16>
    %28 = vector.extract_strided_slice %9 {offsets = [0, 49], sizes = [32, 256], strides = [1, 1]} : vector<32x320xbf16> to vector<32x256xbf16>
    %29 = vector.broadcast %1 : vector<1x256xbf16> to vector<32x256xbf16>
    %30 = arith.mulf %28, %29 : vector<32x256xbf16>
    %31 = tpu.concatenate %12, %13, %16, %19, %20, %23, %26, %27, %30 in 0 : vector<32x256xbf16>, vector<32x256xbf16>, vector<32x256xbf16>, vector<32x256xbf16>, vector<32x256xbf16>, vector<32x256xbf16>, vector<32x256xbf16>, vector<32x256xbf16>, vector<32x256xbf16> -> vector<288x256xbf16>
    %c0_11 = arith.constant 0 : index
    %c0_12 = arith.constant 0 : index
    %32 = vector.load %arg3[%c0_11, %c0_12] : memref<32x288xbf16, #tpu.memory_space<vmem>>, vector<32x288xbf16>
    %cst_13 = arith.constant dense<0.000000e+00> : vector<32x256xf32>
    %33 = tpu.matmul %32, %31, %cst_13 {dimension_numbers = #tpu.dot_dimension_numbers<[1], [0], [0], [1], [0, 0, 1, 1], [], []>} : vector<32x288xbf16>, vector<288x256xbf16>, vector<32x256xf32> -> vector<32x256xf32>
    %c0_14 = arith.constant 0 : index
    %c0_15 = arith.constant 0 : index
    %34 = vector.load %arg4[%c0_14, %c0_15] : memref<32x1xf32, #tpu.memory_space<vmem>>, vector<32x1xf32>
    %35 = vector.broadcast %34 : vector<32x1xf32> to vector<32x256xf32>
    %36 = arith.mulf %33, %35 : vector<32x256xf32>
    %c0_16 = arith.constant 0 : index
    %c0_17 = arith.constant 0 : index
    %37 = vector.load %arg5[%c0_16, %c0_17] : memref<32x1xf32, #tpu.memory_space<vmem>>, vector<32x1xf32>
    %38 = vector.broadcast %37 : vector<32x1xf32> to vector<32x256xf32>
    %39 = arith.addf %36, %38 : vector<32x256xf32>
    %cst_18 = arith.constant 0.000000e+00 : f32
    %40 = vector.broadcast %cst_18 : f32 to vector<32x256xf32>
    %41 = arith.maximumf %39, %40 : vector<32x256xf32>
    %42 = arith.truncf %41 : vector<32x256xf32> to vector<32x256xbf16>
    %c0_19 = arith.constant 0 : index
    %c32_20 = arith.constant 32 : index
    %43 = vector.load %arg10[%c0_19, %c32_20] : memref<32x320xbf16, #tpu.memory_space<vmem>>, vector<32x256xbf16>
    tpu.vector_store %arg10[%c0_19, %c32_20], %42 {strides = array<i32>} : memref<32x320xbf16, #tpu.memory_space<vmem>>, vector<32x256xbf16>,
    %c0_21 = arith.constant 0 : index
    %c0_22 = arith.constant 0 : index
    %44 = vector.load %arg10[%c0_21, %c0_22] : memref<32x320xbf16, #tpu.memory_space<vmem>>, vector<32x320xbf16>
    %45 = vector.extract_strided_slice %44 {offsets = [0, 15], sizes = [32, 256], strides = [1, 1]} : vector<32x320xbf16> to vector<32x256xbf16>
    %46 = vector.broadcast %0 : vector<1x256xbf16> to vector<32x256xbf16>
    %47 = arith.mulf %45, %46 : vector<32x256xbf16>
    %48 = vector.extract_strided_slice %44 {offsets = [0, 16], sizes = [32, 256], strides = [1, 1]} : vector<32x320xbf16> to vector<32x256xbf16>
    %49 = vector.extract_strided_slice %44 {offsets = [0, 17], sizes = [32, 256], strides = [1, 1]} : vector<32x320xbf16> to vector<32x256xbf16>
    %50 = vector.broadcast %1 : vector<1x256xbf16> to vector<32x256xbf16>
    %51 = arith.mulf %49, %50 : vector<32x256xbf16>
    %52 = vector.extract_strided_slice %44 {offsets = [0, 31], sizes = [32, 256], strides = [1, 1]} : vector<32x320xbf16> to vector<32x256xbf16>
    %53 = vector.broadcast %0 : vector<1x256xbf16> to vector<32x256xbf16>
    %54 = arith.mulf %52, %53 : vector<32x256xbf16>
    %55 = vector.extract_strided_slice %44 {offsets = [0, 32], sizes = [32, 256], strides = [1, 1]} : vector<32x320xbf16> to vector<32x256xbf16>
    %56 = vector.extract_strided_slice %44 {offsets = [0, 33], sizes = [32, 256], strides = [1, 1]} : vector<32x320xbf16> to vector<32x256xbf16>
    %57 = vector.broadcast %1 : vector<1x256xbf16> to vector<32x256xbf16>
    %58 = arith.mulf %56, %57 : vector<32x256xbf16>
    %59 = vector.extract_strided_slice %44 {offsets = [0, 47], sizes = [32, 256], strides = [1, 1]} : vector<32x320xbf16> to vector<32x256xbf16>
    %60 = vector.broadcast %0 : vector<1x256xbf16> to vector<32x256xbf16>
    %61 = arith.mulf %59, %60 : vector<32x256xbf16>
    %62 = vector.extract_strided_slice %44 {offsets = [0, 48], sizes = [32, 256], strides = [1, 1]} : vector<32x320xbf16> to vector<32x256xbf16>
    %63 = vector.extract_strided_slice %44 {offsets = [0, 49], sizes = [32, 256], strides = [1, 1]} : vector<32x320xbf16> to vector<32x256xbf16>
    %64 = vector.broadcast %1 : vector<1x256xbf16> to vector<32x256xbf16>
    %65 = arith.mulf %63, %64 : vector<32x256xbf16>
    %66 = tpu.concatenate %47, %48, %51, %54, %55, %58, %61, %62, %65 in 0 : vector<32x256xbf16>, vector<32x256xbf16>, vector<32x256xbf16>, vector<32x256xbf16>, vector<32x256xbf16>, vector<32x256xbf16>, vector<32x256xbf16>, vector<32x256xbf16>, vector<32x256xbf16> -> vector<288x256xbf16>
    %c0_23 = arith.constant 0 : index
    %c0_24 = arith.constant 0 : index
    %67 = vector.load %arg6[%c0_23, %c0_24] : memref<32x288xbf16, #tpu.memory_space<vmem>>, vector<32x288xbf16>
    %cst_25 = arith.constant dense<0.000000e+00> : vector<32x256xf32>
    %68 = tpu.matmul %67, %66, %cst_25 {dimension_numbers = #tpu.dot_dimension_numbers<[1], [0], [0], [1], [0, 0, 1, 1], [], []>} : vector<32x288xbf16>, vector<288x256xbf16>, vector<32x256xf32> -> vector<32x256xf32>
    %c0_26 = arith.constant 0 : index
    %c0_27 = arith.constant 0 : index
    %69 = vector.load %arg7[%c0_26, %c0_27] : memref<32x1xf32, #tpu.memory_space<vmem>>, vector<32x1xf32>
    %70 = vector.broadcast %69 : vector<32x1xf32> to vector<32x256xf32>
    %71 = arith.mulf %68, %70 : vector<32x256xf32>
    %c0_28 = arith.constant 0 : index
    %c0_29 = arith.constant 0 : index
    %72 = vector.load %arg8[%c0_28, %c0_29] : memref<32x1xf32, #tpu.memory_space<vmem>>, vector<32x1xf32>
    %73 = vector.broadcast %72 : vector<32x1xf32> to vector<32x256xf32>
    %74 = arith.addf %71, %73 : vector<32x256xf32>
    %cst_30 = arith.constant 0.000000e+00 : f32
    %75 = vector.broadcast %cst_30 : f32 to vector<32x256xf32>
    %76 = arith.maximumf %74, %75 : vector<32x256xf32>
    %77 = arith.addf %6, %76 : vector<32x256xf32>
    %c0_31 = arith.constant 0 : index
    %c0_32 = arith.constant 0 : index
    %c0_33 = arith.constant 0 : index
    %78 = vector.load %arg9[%c0_31, %c0_32, %c0_33] : memref<1x32x256xf32, #tpu.memory_space<vmem>>, vector<1x32x256xf32>
    %79 = vector.shape_cast %78 : vector<1x32x256xf32> to vector<32x256xf32>
    %80 = vector.shape_cast %77 : vector<32x256xf32> to vector<1x32x256xf32>
    tpu.vector_store %arg9[%c0_31, %c0_32, %c0_33], %80 {strides = array<i32>} : memref<1x32x256xf32, #tpu.memory_space<vmem>>, vector<1x32x256xf32>,
    return
  }
  func.func @transform_0(%arg0: i32) -> (i32, i32, i32) {
    %c0_i32 = arith.constant 0 : i32
    %c0_i32_0 = arith.constant 0 : i32
    %c0_i32_1 = arith.constant 0 : i32
    return %arg0, %c0_i32, %c0_i32_0 : i32, i32, i32
  }
  func.func @transform_1(%arg0: i32) -> (i32, i32) {
    %c0_i32 = arith.constant 0 : i32
    %c0_i32_0 = arith.constant 0 : i32
    %c0_i32_1 = arith.constant 0 : i32
    return %c0_i32, %c0_i32_0 : i32, i32
  }
  func.func @transform_2(%arg0: i32) -> (i32, i32) {
    %c0_i32 = arith.constant 0 : i32
    %c0_i32_0 = arith.constant 0 : i32
    %c0_i32_1 = arith.constant 0 : i32
    return %c0_i32, %c0_i32_0 : i32, i32
  }
  func.func @transform_3(%arg0: i32) -> (i32, i32) {
    %c0_i32 = arith.constant 0 : i32
    %c0_i32_0 = arith.constant 0 : i32
    %c0_i32_1 = arith.constant 0 : i32
    return %c0_i32, %c0_i32_0 : i32, i32
  }
  func.func @transform_4(%arg0: i32) -> (i32, i32) {
    %c0_i32 = arith.constant 0 : i32
    %c0_i32_0 = arith.constant 0 : i32
    %c0_i32_1 = arith.constant 0 : i32
    return %c0_i32, %c0_i32_0 : i32, i32
  }
  func.func @transform_5(%arg0: i32) -> (i32, i32) {
    %c0_i32 = arith.constant 0 : i32
    %c0_i32_0 = arith.constant 0 : i32
    %c0_i32_1 = arith.constant 0 : i32
    return %c0_i32, %c0_i32_0 : i32, i32
  }
  func.func @transform_6(%arg0: i32) -> (i32, i32) {
    %c0_i32 = arith.constant 0 : i32
    %c0_i32_0 = arith.constant 0 : i32
    %c0_i32_1 = arith.constant 0 : i32
    return %c0_i32, %c0_i32_0 : i32, i32
  }
  func.func @transform_7(%arg0: i32) -> (i32, i32) {
    %c0_i32 = arith.constant 0 : i32
    %c0_i32_0 = arith.constant 0 : i32
    %c0_i32_1 = arith.constant 0 : i32
    return %c0_i32, %c0_i32_0 : i32, i32
  }
  func.func @transform_8(%arg0: i32) -> (i32, i32, i32) {
    %c0_i32 = arith.constant 0 : i32
    %c0_i32_0 = arith.constant 0 : i32
    %c0_i32_1 = arith.constant 0 : i32
    return %arg0, %c0_i32, %c0_i32_0 : i32, i32, i32
  }
}

</mosaic_0001>

<llo_original>
// kernel: block_forward.1
$region0: #{block_forward.1}
  #allocation0 [shape = 'u32[]', space=smem, size = 0x4, offset = 0x4, fixed_abs, tag = 'smem constant byte address 0x4 - core index']
  #allocation1 [shape = 'u32[144,128]{1,0:T(1,128)}', space=vmem, size = 0x12000, scoped, tag = 'internal scratch']
  #allocation2 [shape = 'bf16[32,320]{1,0:T(8,128)(2,1)}', space=vmem, size = 0x6000, scoped, tag = 'scratch operand']
  %s0 = inlined_call_operand.vmem [shape: f32[2,32,256], index: 0, kind: input, shape index: {}]
  %s1 = inlined_call_operand.vmem [shape: bf16[2,256], index: 1, kind: input, shape index: {}]
  %s2 = inlined_call_operand.vmem [shape: bf16[32,288], index: 2, kind: input, shape index: {}]
  %s3 = inlined_call_operand.vmem [shape: f32[32,1], index: 3, kind: input, shape index: {}]
  %s4 = inlined_call_operand.vmem [shape: f32[32,1], index: 4, kind: input, shape index: {}]
  %s5 = inlined_call_operand.vmem [shape: bf16[32,288], index: 5, kind: input, shape index: {}]
  %s6 = inlined_call_operand.vmem [shape: f32[32,1], index: 6, kind: input, shape index: {}]
  %s7 = inlined_call_operand.vmem [shape: f32[32,1], index: 7, kind: input, shape index: {}]
  %s8 = inlined_call_operand.vmem [shape: f32[2,32,256], index: 8, kind: output, shape index: {}]
  %s9 = sld [smem:[#allocation0]]
  $region65: #{block_forward.1} parent=0
    _
  %s11 = ssub.s32 1, %s9
  %s12 = scalar_select 0, %s11, %s9
  loop: start=0, step=1, limit=4
  $region2: #{block_forward.1} parent=0 // loop_pre_header
    _
  $region3: #{block_forward.1} parent=0 // loop_header
    %s14 = sphi 0, %s18
    %p15 = scmp.ge.s32.totalorder %s14, 4
    %s24 = sphi 0, %s26
    %s27 = sphi 0, %s24
    %s28 = sphi 0, %s27
    %s44 = sphi 0, %s28
    %s48 = sphi 0, %s48
    %s50 = sphi 0, %s48
    %s51 = sphi 0, %s50
    %s65 = sphi 0, %s51
    %s69 = sphi 0, %s69
    %s71 = sphi 0, %s69
    %s72 = sphi 0, %s71
    %s86 = sphi 0, %s72
    %s90 = sphi 0, %s90
    %s92 = sphi 0, %s90
    %s93 = sphi 0, %s92
    %s107 = sphi 0, %s93
    %s111 = sphi 0, %s111
    %s113 = sphi 0, %s111
    %s114 = sphi 0, %s113
    %s128 = sphi 0, %s114
    %s132 = sphi 0, %s132
    %s134 = sphi 0, %s132
    %s135 = sphi 0, %s134
    %s149 = sphi 0, %s135
    %s153 = sphi 0, %s153
    %s155 = sphi 0, %s153
    %s156 = sphi 0, %s155
    %s170 = sphi 0, %s156
    %s174 = sphi 0, %s174
    %s176 = sphi 0, %s174
    %s177 = sphi 0, %s176
    %s191 = sphi 0, %s177
    %s197 = sphi 0, %s199
    %s200 = sphi 0, %s197
    %s201 = sphi 0, %s200
    %s217 = sphi 0, %s201
  $region4: #{block_forward.1} parent=0 // loop_header_branch
    %17 = sbr.rel (%p15) target = $region8
  $region5: #{block_forward.1} parent=0 // loop_body
    %s19 = ssub.s32 %s14, 1
    %s20 = ssub.s32 %s14, 2
    %s21 = sadd.s32 %s14, 1
    %s22 = ssub.s32 %s14, %s21
    %p23 = scmp.eq.s32.totalorder %s22, 0
    %s25 = sadd.s32 %s24, 1
    %s26 = scalar_select %p23, %s24, %s25
    %p29 = pneg %p23
    %p30 = scmp.eq.s32.totalorder %s14, 1
    %p31 = por %p29, %p30
    %p32 = scmp.ne.s32.totalorder %s24, %s27
    %p33 = scmp.eq.s32.totalorder %s14, 0
    %p34 = por %p32, %p33
    %p35 = scmp.ne.s32.totalorder %s24, %s27
    %p36 = scmp.eq.s32.totalorder %s19, 1
    %p37 = por %p35, %p36
    %p38 = scmp.ne.s32.totalorder %s27, %s28
    %p39 = scmp.eq.s32.totalorder %s19, 0
    %p40 = por %p38, %p39
    %p41 = scmp.ne.s32.totalorder %s27, %s28
    %p42 = scmp.eq.s32.totalorder %s20, 1
    %p43 = por %p41, %p42
    %p45 = scmp.ne.s32.totalorder %s28, %s44
    %p46 = scmp.eq.s32.totalorder %s20, 0
    %p47 = por %p45, %p46
    %s49 = sadd.s32 %s48, 1
    %p52 = scmp.eq.s32.totalorder %s14, 1
    %p53 = scmp.ne.s32.totalorder %s48, %s50
    %p54 = scmp.eq.s32.totalorder %s14, 0
    %p55 = por %p53, %p54
    %p56 = scmp.ne.s32.totalorder %s48, %s50
    %p57 = scmp.eq.s32.totalorder %s19, 1
    %p58 = por %p56, %p57
    %p59 = scmp.ne.s32.totalorder %s50, %s51
    %p60 = scmp.eq.s32.totalorder %s19, 0
    %p61 = por %p59, %p60
    %p62 = scmp.ne.s32.totalorder %s50, %s51
    %p63 = scmp.eq.s32.totalorder %s20, 1
    %p64 = por %p62, %p63
    %p66 = scmp.ne.s32.totalorder %s51, %s65
    %p67 = scmp.eq.s32.totalorder %s20, 0
    %p68 = por %p66, %p67
    %s70 = sadd.s32 %s69, 1
    %p73 = scmp.eq.s32.totalorder %s14, 1
    %p74 = scmp.ne.s32.totalorder %s69, %s71
    %p75 = scmp.eq.s32.totalorder %s14, 0
    %p76 = por %p74, %p75
    %p77 = scmp.ne.s32.totalorder %s69, %s71
    %p78 = scmp.eq.s32.totalorder %s19, 1
    %p79 = por %p77, %p78
    %p80 = scmp.ne.s32.totalorder %s71, %s72
    %p81 = scmp.eq.s32.totalorder %s19, 0
    %p82 = por %p80, %p81
    %p83 = scmp.ne.s32.totalorder %s71, %s72
    %p84 = scmp.eq.s32.totalorder %s20, 1
    %p85 = por %p83, %p84
    %p87 = scmp.ne.s32.totalorder %s72, %s86
    %p88 = scmp.eq.s32.totalorder %s20, 0
    %p89 = por %p87, %p88
    %s91 = sadd.s32 %s90, 1
    %p94 = scmp.eq.s32.totalorder %s14, 1
    %p95 = scmp.ne.s32.totalorder %s90, %s92
    %p96 = scmp.eq.s32.totalorder %s14, 0
    %p97 = por %p95, %p96
    %p98 = scmp.ne.s32.totalorder %s90, %s92
    %p99 = scmp.eq.s32.totalorder %s19, 1
    %p100 = por %p98, %p99
    %p101 = scmp.ne.s32.totalorder %s92, %s93
    %p102 = scmp.eq.s32.totalorder %s19, 0
    %p103 = por %p101, %p102
    %p104 = scmp.ne.s32.totalorder %s92, %s93
    %p105 = scmp.eq.s32.totalorder %s20, 1
    %p106 = por %p104, %p105
    %p108 = scmp.ne.s32.totalorder %s93, %s107
    %p109 = scmp.eq.s32.totalorder %s20, 0
    %p110 = por %p108, %p109
    %s112 = sadd.s32 %s111, 1
    %p115 = scmp.eq.s32.totalorder %s14, 1
    %p116 = scmp.ne.s32.totalorder %s111, %s113
    %p117 = scmp.eq.s32.totalorder %s14, 0
    %p118 = por %p116, %p117
    %p119 = scmp.ne.s32.totalorder %s111, %s113
    %p120 = scmp.eq.s32.totalorder %s19, 1
    %p121 = por %p119, %p120
    %p122 = scmp.ne.s32.totalorder %s113, %s114
    %p123 = scmp.eq.s32.totalorder %s19, 0
    %p124 = por %p122, %p123
    %p125 = scmp.ne.s32.totalorder %s113, %s114
    %p126 = scmp.eq.s32.totalorder %s20, 1
    %p127 = por %p125, %p126
    %p129 = scmp.ne.s32.totalorder %s114, %s128
    %p130 = scmp.eq.s32.totalorder %s20, 0
    %p131 = por %p129, %p130
    %s133 = sadd.s32 %s132, 1
    %p136 = scmp.eq.s32.totalorder %s14, 1
    %p137 = scmp.ne.s32.totalorder %s132, %s134
    %p138 = scmp.eq.s32.totalorder %s14, 0
    %p139 = por %p137, %p138
    %p140 = scmp.ne.s32.totalorder %s132, %s134
    %p141 = scmp.eq.s32.totalorder %s19, 1
    %p142 = por %p140, %p141
    %p143 = scmp.ne.s32.totalorder %s134, %s135
    %p144 = scmp.eq.s32.totalorder %s19, 0
    %p145 = por %p143, %p144
    %p146 = scmp.ne.s32.totalorder %s134, %s135
    %p147 = scmp.eq.s32.totalorder %s20, 1
    %p148 = por %p146, %p147
    %p150 = scmp.ne.s32.totalorder %s135, %s149
    %p151 = scmp.eq.s32.totalorder %s20, 0
    %p152 = por %p150, %p151
    %s154 = sadd.s32 %s153, 1
    %p157 = scmp.eq.s32.totalorder %s14, 1
    %p158 = scmp.ne.s32.totalorder %s153, %s155
    %p159 = scmp.eq.s32.totalorder %s14, 0
    %p160 = por %p158, %p159
    %p161 = scmp.ne.s32.totalorder %s153, %s155
    %p162 = scmp.eq.s32.totalorder %s19, 1
    %p163 = por %p161, %p162
    %p164 = scmp.ne.s32.totalorder %s155, %s156
    %p165 = scmp.eq.s32.totalorder %s19, 0
    %p166 = por %p164, %p165
    %p167 = scmp.ne.s32.totalorder %s155, %s156
    %p168 = scmp.eq.s32.totalorder %s20, 1
    %p169 = por %p167, %p168
    %p171 = scmp.ne.s32.totalorder %s156, %s170
    %p172 = scmp.eq.s32.totalorder %s20, 0
    %p173 = por %p171, %p172
    %s175 = sadd.s32 %s174, 1
    %p178 = scmp.eq.s32.totalorder %s14, 1
    %p179 = scmp.ne.s32.totalorder %s174, %s176
    %p180 = scmp.eq.s32.totalorder %s14, 0
    %p181 = por %p179, %p180
    %p182 = scmp.ne.s32.totalorder %s174, %s176
    %p183 = scmp.eq.s32.totalorder %s19, 1
    %p184 = por %p182, %p183
    %p185 = scmp.ne.s32.totalorder %s176, %s177
    %p186 = scmp.eq.s32.totalorder %s19, 0
    %p187 = por %p185, %p186
    %p188 = scmp.ne.s32.totalorder %s176, %s177
    %p189 = scmp.eq.s32.totalorder %s20, 1
    %p190 = por %p188, %p189
    %p192 = scmp.ne.s32.totalorder %s177, %s191
    %p193 = scmp.eq.s32.totalorder %s20, 0
    %p194 = por %p192, %p193
    %s195 = ssub.s32 %s14, %s21
    %p196 = scmp.eq.s32.totalorder %s195, 0
    %s198 = sadd.s32 %s197, 1
    %s199 = scalar_select %p196, %s197, %s198
    %p202 = pneg %p196
    %p203 = scmp.eq.s32.totalorder %s14, 1
    %p204 = por %p202, %p203
    %p205 = scmp.ne.s32.totalorder %s197, %s200
    %p206 = scmp.eq.s32.totalorder %s14, 0
    %p207 = por %p205, %p206
    %p208 = scmp.ne.s32.totalorder %s197, %s200
    %p209 = scmp.eq.s32.totalorder %s19, 1
    %p210 = por %p208, %p209
    %p211 = scmp.ne.s32.totalorder %s200, %s201
    %p212 = scmp.eq.s32.totalorder %s19, 0
    %p213 = por %p211, %p212
    %p214 = scmp.ne.s32.totalorder %s200, %s201
    %p215 = scmp.eq.s32.totalorder %s20, 1
    %p216 = por %p214, %p215
    %p218 = scmp.ne.s32.totalorder %s201, %s217
    %p219 = scmp.eq.s32.totalorder %s20, 0
    %p220 = por %p218, %p219
    %p221 = scmp.le.s32.totalorder 1, %s14
    %p222 = scmp.lt.s32.totalorder %s14, 3
    %p223 = pnand %p221, %p222
    %p224 = pneg %p223
    // Predicated region
    $region9: #{block_forward.1} parent=5 // pred_check
      _
    $region10: #{block_forward.1} parent=5 // pred_check_branch
      %226 = sbr.rel (%p223) target = $region12
    $region11: #{block_forward.1} parent=5 // pred_region
      %s227 = ssub.s32 %s14, 1
      // Predicated region
      $region13: #{block_forward.1} parent=11 // pred_check
        %p228 = pneg %p61
      $region14: #{block_forward.1} parent=11 // pred_check_branch
        %230 = sbr.rel (%p228) target = $region16
      $region15: #{block_forward.1} parent=11 // pred_region
        _
      $region16: #{block_forward.1} parent=11 // pred_fallthru
        _
      // Predicated region
      $region17: #{block_forward.1} parent=11 // pred_check
        %p231 = pneg %p82
      $region18: #{block_forward.1} parent=11 // pred_check_branch
        %233 = sbr.rel (%p231) target = $region20
      $region19: #{block_forward.1} parent=11 // pred_region
        _
      $region20: #{block_forward.1} parent=11 // pred_fallthru
        _
      // Predicated region
      $region21: #{block_forward.1} parent=11 // pred_check
        %p234 = pneg %p103
      $region22: #{block_forward.1} parent=11 // pred_check_branch
        %236 = sbr.rel (%p234) target = $region24
      $region23: #{block_forward.1} parent=11 // pred_region
        _
      $region24: #{block_forward.1} parent=11 // pred_fallthru
        _
      // Predicated region
      $region25: #{block_forward.1} parent=11 // pred_check
        %p237 = pneg %p124
      $region26: #{block_forward.1} parent=11 // pred_check_branch
        %239 = sbr.rel (%p237) target = $region28
      $region27: #{block_forward.1} parent=11 // pred_region
        _
      $region28: #{block_forward.1} parent=11 // pred_fallthru
        _
      // Predicated region
      $region29: #{block_forward.1} parent=11 // pred_check
        %p240 = pneg %p145
      $region30: #{block_forward.1} parent=11 // pred_check_branch
        %242 = sbr.rel (%p240) target = $region32
      $region31: #{block_forward.1} parent=11 // pred_region
        _
      $region32: #{block_forward.1} parent=11 // pred_fallthru
        _
      // Predicated region
      $region33: #{block_forward.1} parent=11 // pred_check
        %p243 = pneg %p166
      $region34: #{block_forward.1} parent=11 // pred_check_branch
        %245 = sbr.rel (%p243) target = $region36
      $region35: #{block_forward.1} parent=11 // pred_region
        _
      $region36: #{block_forward.1} parent=11 // pred_fallthru
        _
      // Predicated region
      $region37: #{block_forward.1} parent=11 // pred_check
        %p246 = pneg %p187
      $region38: #{block_forward.1} parent=11 // pred_check_branch
        %248 = sbr.rel (%p246) target = $region40
      $region39: #{block_forward.1} parent=11 // pred_region
        _
      $region40: #{block_forward.1} parent=11 // pred_fallthru
        _
    $region12: #{block_forward.1} parent=5 // pred_fallthru
      _
    %p249 = scmp.lt.s32.totalorder %s14, 2
    // Predicated region
    $region41: #{block_forward.1} parent=5 // pred_check
      %p250 = pneg %p249
    $region42: #{block_forward.1} parent=5 // pred_check_branch
      %252 = sbr.rel (%p250) target = $region44
    $region43: #{block_forward.1} parent=5 // pred_region
      // Predicated region
      $region45: #{block_forward.1} parent=43 // pred_check
        %p253 = pneg %p34
      $region46: #{block_forward.1} parent=43 // pred_check_branch
        %255 = sbr.rel (%p253) target = $region48
      $region47: #{block_forward.1} parent=43 // pred_region
        %p256 = scmp.lt.s32.totalorder %s14, 1
        %s257 = scalar_select %p256, %s14, 1
        %s258 = smul.addr %s257, 8
        %s259 = smul.addr %s258, 8
        %s260 = scalar_lea.vmem %s0, %s259
      $region48: #{block_forward.1} parent=43 // pred_fallthru
        _
    $region44: #{block_forward.1} parent=5 // pred_fallthru
      _
    %p261 = scmp.le.s32.totalorder 1, %s14
    %p262 = scmp.lt.s32.totalorder %s14, 3
    %p263 = pnand %p261, %p262
    %p264 = pneg %p263
    // Predicated region
    $region49: #{block_forward.1} parent=5 // pred_check
      _
    $region50: #{block_forward.1} parent=5 // pred_check_branch
      %266 = sbr.rel (%p263) target = $region52
    $region51: #{block_forward.1} parent=5 // pred_region
      %s267 = ssub.s32 %s14, 1
      %p268 = scmp.lt.s32.totalorder %s19, 1
      %s269 = scalar_select %p268, %s19, 1
      %s270 = smul.addr %s269, 8
      %s271 = smul.addr %s270, 8
      %s272 = scalar_lea.vmem %s0, %s271
      %p273 = pneg %p40
      %p274 = pneg %p37
      %p275 = pneg %p61
      %p276 = pneg %p58
      %p277 = pneg %p82
      %p278 = pneg %p79
      %p279 = pneg %p103
      %p280 = pneg %p100
      %p281 = pneg %p124
      %p282 = pneg %p121
      %p283 = pneg %p145
      %p284 = pneg %p142
      %p285 = pneg %p166
      %p286 = pneg %p163
      %p287 = pneg %p187
      %p288 = pneg %p184
      %p289 = pneg %p213
      %p290 = pneg %p210
      %p291 = scmp.lt.s32.totalorder %s19, 1
      %s292 = scalar_select %p291, %s19, 1
      %s293 = smul.addr %s292, 8
      %s294 = smul.addr %s293, 8
      %s295 = scalar_lea.vmem %s8, %s294
      %p296 = scmp.lt.s32.totalorder %s19, 1
      %s297 = scalar_select %p296, %s19, 1
      %s298 = smul.addr %s297, 8
      %s299 = smul.addr %s298, 8
      %s300 = scalar_lea.vmem %s0, %s299
      %p301 = scmp.lt.s32.totalorder %s19, 1
      %s302 = scalar_select %p301, %s19, 1
      %s303 = smul.addr %s302, 8
      %s304 = smul.addr %s303, 8
      %s305 = scalar_lea.vmem %s8, %s304
      %v307 = vld [vmem:[%s1] sm:$0x3]
      %vm308 = vcmask 257024
      %309 = vst.msk [vmem:[#allocation2] sm:$0xf] %vm308, 0
      %310 = vst.msk [vmem:[#allocation2 + $0xc] sm:$0xf] %vm308, 0
      %311 = vst.msk [vmem:[#allocation2 + $0x18] sm:$0xf] %vm308, 0
      %312 = vst.msk [vmem:[#allocation2 + $0x24] sm:$0xf] %vm308, 0
      %vm313 = vcmask 519424
      %314 = vst.msk [vmem:[#allocation2 + $0x8] sm:$0xf] %vm313, 0
      %315 = vst.msk [vmem:[#allocation2 + $0x14] sm:$0xf] %vm313, 0
      %316 = vst.msk [vmem:[#allocation2 + $0x20] sm:$0xf] %vm313, 0
      %317 = vst.msk [vmem:[#allocation2 + $0x2c] sm:$0xf] %vm313, 0
      %v318 = vld [vmem:[%s300] sm:$0xff]
      %v319 = vld [vmem:[%s300 + $0x8] sm:$0xff]
      %v320 = vld [vmem:[%s300 + $0x10] sm:$0xff]
      %v321 = vld [vmem:[%s300 + $0x18] sm:$0xff]
      %v322 = vld [vmem:[%s300 + $0x20] sm:$0xff]
      %v323 = vld [vmem:[%s300 + $0x28] sm:$0xff]
      %v324 = vld [vmem:[%s300 + $0x30] sm:$0xff]
      %v325 = vld [vmem:[%s300 + $0x38] sm:$0xff]
      %v326 = vpack.c.bf16 %v320, %v318
      %v327 = vpack.c.bf16 %v321, %v319
      %v328 = vpack.c.bf16 %v324, %v322
      %v329 = vpack.c.bf16 %v325, %v323
      %v334 = vunpack.c.l.b16 %v326
      %v335 = vunpack.c.l.b16 %v327
      %v336 = vunpack.c.h.b16 %v326
      %v337 = vunpack.c.h.b16 %v327
      %v338 = vunpack.c.l.b16 %v328
      %v339 = vunpack.c.l.b16 %v329
      %v340 = vunpack.c.h.b16 %v328
      %v341 = vunpack.c.h.b16 %v329
      %v342 = vpack.c.b16 %v335, %v334
      %v343 = vpack.c.b16 %v337, %v336
      %v344 = vpack.c.b16 %v339, %v338
      %v345 = vpack.c.b16 %v341, %v340
      %346 = vrot.lane.b32.xlu0 %v342, 32
      %v347 = vpop.permute.xlu0 %346
      %348 = vrot.lane.b32.xlu0 %v343, 32
      %v349 = vpop.permute.xlu0 %348
      %350 = vrot.lane.b32.xlu0 %v344, 32
      %v351 = vpop.permute.xlu0 %350
      %352 = vrot.lane.b32.xlu0 %v345, 32
      %v353 = vpop.permute.xlu0 %352
      %v354 = vrot.slane %v347, 4
      %v355 = vrot.slane %v349, 4
      %v356 = vrot.slane %v351, 4
      %v357 = vrot.slane %v353, 4
      %vm358 = vcmask 261120
      %v359 = vsel %vm358, %v354, %v347
      %v360 = vsel %vm358, %v355, %v349
      %v361 = vsel %vm358, %v356, %v351
      %v362 = vsel %vm358, %v357, %v353
      %vm371 = vcmask 1043712
      %vm372 = vcmask 1047556
      %vm373 = vmor %vm372, %vm371
      %374 = vst.msk [vmem:[#allocation2] sm:$0xff] %vm373, %v359
      %375 = vst.msk [vmem:[#allocation2 + $0x8] sm:$0xf] %vm308, %v354
      %376 = vst.msk [vmem:[#allocation2 + $0xc] sm:$0xff] %vm373, %v360
      %377 = vst.msk [vmem:[#allocation2 + $0x14] sm:$0xf] %vm308, %v355
      %378 = vst.msk [vmem:[#allocation2 + $0x18] sm:$0xff] %vm373, %v361
      %379 = vst.msk [vmem:[#allocation2 + $0x20] sm:$0xf] %vm308, %v356
      %380 = vst.msk [vmem:[#allocation2 + $0x24] sm:$0xff] %vm373, %v362
      %381 = vst.msk [vmem:[#allocation2 + $0x2c] sm:$0xf] %vm308, %v357
      %v382 = vld [vmem:[#allocation2] sm:$0xff]
      %v383 = vld [vmem:[#allocation2 + $0x8] sm:$0xf]
      %v384 = vld [vmem:[#allocation2 + $0xc] sm:$0xff]
      %v385 = vld [vmem:[#allocation2 + $0x14] sm:$0xf]
      %v386 = vld [vmem:[#allocation2 + $0x18] sm:$0xff]
      %v387 = vld [vmem:[#allocation2 + $0x20] sm:$0xf]
      %v388 = vld [vmem:[#allocation2 + $0x24] sm:$0xff]
      %v389 = vld [vmem:[#allocation2 + $0x2c] sm:$0xf]
      %v392 = vunpack.c.l.s4 1966171168
      %v393 = vunpack.c.0.s8 %v392
      %v394 = vlaneseq
      %v395 = vshrl.u32 %v394, 7
      %v396 = vsub.s32 %v393, %v395
      %v397 = vrot.slane %v307, %v396
      %v398 = vcombine.high %v397, %v397
      %v400 = vunpack.c.l.s4 1966171168
      %v401 = vunpack.c.0.s8 %v400
      %v402 = vlaneseq
      %v403 = vshrl.u32 %v402, 7
      %v404 = vsub.s32 %v401, %v403
      %v405 = vrot.slane %v397, %v404
      %v407 = vunpack.c.l.s4 1966171168
      %v408 = vunpack.c.0.s8 %v407
      %v409 = vlaneseq
      %v410 = vshrl.u32 %v409, 7
      %v411 = vsub.s32 %v408, %v410
      %v412 = vrot.slane %v398, %v411
      %v414 = vpack.i.b16 %v405, %v405
      %v416 = vlaneseq
      %v417 = vshrl.u32 %v416, 7
      %v418 = vsub.s32 0, %v417
      %v419 = vrot.slane %v414, %v418
      %v421 = vpack.i.b16 %v412, %v412
      %v423 = vlaneseq
      %v424 = vshrl.u32 %v423, 7
      %v425 = vsub.s32 0, %v424
      %v426 = vrot.slane %v421, %v425
      %v429 = vunpack.c.l.b16 %v419
      %v430 = vunpack.c.l.b16 %v426
      %v431 = vpack.c.b16 %v430, %v429
      %432 = vrot.lane.b32.xlu0 %v431, 15
      %v433 = vpop.permute.xlu0 %432
      %v434 = vrot.slane %v433, 4
      %vm435 = vcmask 121856
      %v436 = vsel %vm435, %v434, %v433
      %v439 = vmul.bf16 %v382, %v436
      %v440 = vmul.bf16 %v383, %v434
      %v441 = vmul.bf16 %v384, %v436
      %v442 = vmul.bf16 %v385, %v434
      %v443 = vmul.bf16 %v386, %v436
      %v444 = vmul.bf16 %v387, %v434
      %v445 = vmul.bf16 %v388, %v436
      %v446 = vmul.bf16 %v389, %v434
      %v447 = vshrl.u32 %v405, 16
      %v448 = vpack.i.b16 %v447, %v447
      %v450 = vlaneseq
      %v451 = vshrl.u32 %v450, 7
      %v452 = vsub.s32 0, %v451
      %v453 = vrot.slane %v448, %v452
      %v454 = vshrl.u32 %v412, 16
      %v455 = vpack.i.b16 %v454, %v454
      %v457 = vlaneseq
      %v458 = vshrl.u32 %v457, 7
      %v459 = vsub.s32 0, %v458
      %v460 = vrot.slane %v455, %v459
      %v463 = vunpack.c.l.b16 %v453
      %v464 = vunpack.c.l.b16 %v460
      %v465 = vpack.c.b16 %v464, %v463
      %466 = vrot.lane.b32.xlu0 %v465, 17
      %v467 = vpop.permute.xlu0 %466
      %v468 = vrot.slane %v467, 4
      %vm469 = vcmask 138240
      %v470 = vsel %vm469, %v468, %v467
      %v473 = vmul.bf16 %v382, %v470
      %v474 = vmul.bf16 %v383, %v468
      %v475 = vmul.bf16 %v384, %v470
      %v476 = vmul.bf16 %v385, %v468
      %v477 = vmul.bf16 %v386, %v470
      %v478 = vmul.bf16 %v387, %v468
      %v479 = vmul.bf16 %v388, %v470
      %v480 = vmul.bf16 %v389, %v468
      %481 = vrot.lane.b32.xlu0 %v431, 31
      %v482 = vpop.permute.xlu0 %481
      %v483 = vrot.slane %v482, 4
      %vm484 = vcmask 252928
      %v485 = vsel %vm484, %v483, %v482
      %v488 = vmul.bf16 %v382, %v485
      %v489 = vmul.bf16 %v383, %v483
      %v490 = vmul.bf16 %v384, %v485
      %v491 = vmul.bf16 %v385, %v483
      %v492 = vmul.bf16 %v386, %v485
      %v493 = vmul.bf16 %v387, %v483
      %v494 = vmul.bf16 %v388, %v485
      %v495 = vmul.bf16 %v389, %v483
      %496 = vrot.lane.b32.xlu0 %v465, 33
      %v497 = vpop.permute.xlu0 %496
      %v498 = vrot.slane %v497, 4
      %vm499 = vcmask 269312
      %v500 = vsel %vm499, %v498, %v497
      %v503 = vmul.bf16 %v382, %v500
      %v504 = vmul.bf16 %v383, %v498
      %v505 = vmul.bf16 %v384, %v500
      %v506 = vmul.bf16 %v385, %v498
      %v507 = vmul.bf16 %v386, %v500
      %v508 = vmul.bf16 %v387, %v498
      %v509 = vmul.bf16 %v388, %v500
      %v510 = vmul.bf16 %v389, %v498
      %511 = vrot.lane.b32.xlu0 %v431, 47
      %v512 = vpop.permute.xlu0 %511
      %v513 = vrot.slane %v512, 4
      %vm514 = vcmask 384000
      %v515 = vsel %vm514, %v513, %v512
      %v518 = vmul.bf16 %v382, %v515
      %v519 = vmul.bf16 %v383, %v513
      %v520 = vmul.bf16 %v384, %v515
      %v521 = vmul.bf16 %v385, %v513
      %v522 = vmul.bf16 %v386, %v515
      %v523 = vmul.bf16 %v387, %v513
      %v524 = vmul.bf16 %v388, %v515
      %v525 = vmul.bf16 %v389, %v513
      %526 = vrot.lane.b32.xlu0 %v465, 49
      %v527 = vpop.permute.xlu0 %526
      %v528 = vrot.slane %v527, 4
      %vm529 = vcmask 400384
      %v530 = vsel %vm529, %v528, %v527
      %v533 = vmul.bf16 %v382, %v530
      %v534 = vmul.bf16 %v383, %v528
      %v535 = vmul.bf16 %v384, %v530
      %v536 = vmul.bf16 %v385, %v528
      %v537 = vmul.bf16 %v386, %v530
      %v538 = vmul.bf16 %v387, %v528
      %v539 = vmul.bf16 %v388, %v530
      %v540 = vmul.bf16 %v389, %v528
      %v549 = vunpack.c.l.b16 %v439
      %v550 = vunpack.c.h.b16 %v439
      %v551 = vunpack.c.l.b16 %v440
      %v552 = vunpack.c.l.b16 %v441
      %v553 = vunpack.c.h.b16 %v441
      %v554 = vunpack.c.l.b16 %v442
      %v555 = vunpack.c.l.b16 %v443
      %v556 = vunpack.c.h.b16 %v443
      %v557 = vunpack.c.l.b16 %v444
      %v558 = vunpack.c.l.b16 %v445
      %v559 = vunpack.c.h.b16 %v445
      %v560 = vunpack.c.l.b16 %v446
      %v561 = vpack.c.b16 %v552, %v549
      %v562 = vpack.c.b16 %v553, %v550
      %v563 = vpack.c.b16 %v554, %v551
      %v564 = vpack.c.b16 %v558, %v555
      %v565 = vpack.c.b16 %v559, %v556
      %v566 = vpack.c.b16 %v560, %v557
      %v575 = vunpack.c.l.b16 %v382
      %v576 = vunpack.c.h.b16 %v382
      %v577 = vunpack.c.l.b16 %v383
      %v578 = vunpack.c.l.b16 %v384
      %v579 = vunpack.c.h.b16 %v384
      %v580 = vunpack.c.l.b16 %v385
      %v581 = vunpack.c.l.b16 %v386
      %v582 = vunpack.c.h.b16 %v386
      %v583 = vunpack.c.l.b16 %v387
      %v584 = vunpack.c.l.b16 %v388
      %v585 = vunpack.c.h.b16 %v388
      %v586 = vunpack.c.l.b16 %v389
      %v587 = vpack.c.b16 %v578, %v575
      %v588 = vpack.c.b16 %v579, %v576
      %v589 = vpack.c.b16 %v580, %v577
      %v590 = vpack.c.b16 %v584, %v581
      %v591 = vpack.c.b16 %v585, %v582
      %v592 = vpack.c.b16 %v586, %v583
      %593 = vrot.lane.b32.xlu0 %v587, 127
      %v594 = vpop.permute.xlu0 %593
      %595 = vrot.lane.b32.xlu0 %v588, 127
      %v596 = vpop.permute.xlu0 %595
      %597 = vrot.lane.b32.xlu0 %v589, 127
      %v598 = vpop.permute.xlu0 %597
      %599 = vrot.lane.b32.xlu0 %v590, 127
      %v600 = vpop.permute.xlu0 %599
      %601 = vrot.lane.b32.xlu0 %v591, 127
      %v602 = vpop.permute.xlu0 %601
      %603 = vrot.lane.b32.xlu0 %v592, 127
      %v604 = vpop.permute.xlu0 %603
      %vm605 = vcmask 1039360
      %v606 = vsel %vm605, %v594, %v596
      %v607 = vsel %vm605, %v596, %v598
      %v608 = vsel %vm605, %v600, %v602
      %v609 = vsel %vm605, %v602, %v604
      %v618 = vunpack.c.l.b16 %v473
      %v619 = vunpack.c.h.b16 %v473
      %v620 = vunpack.c.l.b16 %v474
      %v621 = vunpack.c.l.b16 %v475
      %v622 = vunpack.c.h.b16 %v475
      %v623 = vunpack.c.l.b16 %v476
      %v624 = vunpack.c.l.b16 %v477
      %v625 = vunpack.c.h.b16 %v477
      %v626 = vunpack.c.l.b16 %v478
      %v627 = vunpack.c.l.b16 %v479
      %v628 = vunpack.c.h.b16 %v479
      %v629 = vunpack.c.l.b16 %v480
      %v630 = vpack.c.b16 %v621, %v618
      %v631 = vpack.c.b16 %v622, %v619
      %v632 = vpack.c.b16 %v623, %v620
      %v633 = vpack.c.b16 %v627, %v624
      %v634 = vpack.c.b16 %v628, %v625
      %v635 = vpack.c.b16 %v629, %v626
      %636 = vrot.lane.b32.xlu0 %v630, 126
      %v637 = vpop.permute.xlu0 %636
      %638 = vrot.lane.b32.xlu0 %v631, 126
      %v639 = vpop.permute.xlu0 %638
      %640 = vrot.lane.b32.xlu0 %v632, 126
      %v641 = vpop.permute.xlu0 %640
      %642 = vrot.lane.b32.xlu0 %v633, 126
      %v643 = vpop.permute.xlu0 %642
      %644 = vrot.lane.b32.xlu0 %v634, 126
      %v645 = vpop.permute.xlu0 %644
      %646 = vrot.lane.b32.xlu0 %v635, 126
      %v647 = vpop.permute.xlu0 %646
      %vm648 = vcmask 1031168
      %v649 = vsel %vm648, %v637, %v639
      %v650 = vsel %vm648, %v639, %v641
      %v651 = vsel %vm648, %v643, %v645
      %v652 = vsel %vm648, %v645, %v647
      %v661 = vunpack.c.l.b16 %v488
      %v662 = vunpack.c.h.b16 %v488
      %v663 = vunpack.c.l.b16 %v489
      %v664 = vunpack.c.l.b16 %v490
      %v665 = vunpack.c.h.b16 %v490
      %v666 = vunpack.c.l.b16 %v491
      %v667 = vunpack.c.l.b16 %v492
      %v668 = vunpack.c.h.b16 %v492
      %v669 = vunpack.c.l.b16 %v493
      %v670 = vunpack.c.l.b16 %v494
      %v671 = vunpack.c.h.b16 %v494
      %v672 = vunpack.c.l.b16 %v495
      %v673 = vpack.c.b16 %v664, %v661
      %v674 = vpack.c.b16 %v665, %v662
      %v675 = vpack.c.b16 %v666, %v663
      %v676 = vpack.c.b16 %v670, %v667
      %v677 = vpack.c.b16 %v671, %v668
      %v678 = vpack.c.b16 %v672, %v669
      %679 = vrot.lane.b32.xlu0 %v673, 112
      %v680 = vpop.permute.xlu0 %679
      %681 = vrot.lane.b32.xlu0 %v674, 112
      %v682 = vpop.permute.xlu0 %681
      %683 = vrot.lane.b32.xlu0 %v675, 112
      %v684 = vpop.permute.xlu0 %683
      %685 = vrot.lane.b32.xlu0 %v676, 112
      %v686 = vpop.permute.xlu0 %685
      %687 = vrot.lane.b32.xlu0 %v677, 112
      %v688 = vpop.permute.xlu0 %687
      %689 = vrot.lane.b32.xlu0 %v678, 112
      %v690 = vpop.permute.xlu0 %689
      %vm691 = vcmask 916480
      %v692 = vsel %vm691, %v680, %v682
      %v693 = vsel %vm691, %v682, %v684
      %v694 = vsel %vm691, %v686, %v688
      %v695 = vsel %vm691, %v688, %v690
      %696 = vrot.lane.b32.xlu0 %v587, 111
      %v697 = vpop.permute.xlu0 %696
      %698 = vrot.lane.b32.xlu0 %v588, 111
      %v699 = vpop.permute.xlu0 %698
      %700 = vrot.lane.b32.xlu0 %v589, 111
      %v701 = vpop.permute.xlu0 %700
      %702 = vrot.lane.b32.xlu0 %v590, 111
      %v703 = vpop.permute.xlu0 %702
      %704 = vrot.lane.b32.xlu0 %v591, 111
      %v705 = vpop.permute.xlu0 %704
      %706 = vrot.lane.b32.xlu0 %v592, 111
      %v707 = vpop.permute.xlu0 %706
      %vm708 = vcmask 908288
      %v709 = vsel %vm708, %v697, %v699
      %v710 = vsel %vm708, %v699, %v701
      %v711 = vsel %vm708, %v703, %v705
      %v712 = vsel %vm708, %v705, %v707
      %v721 = vunpack.c.l.b16 %v503
      %v722 = vunpack.c.h.b16 %v503
      %v723 = vunpack.c.l.b16 %v504
      %v724 = vunpack.c.l.b16 %v505
      %v725 = vunpack.c.h.b16 %v505
      %v726 = vunpack.c.l.b16 %v506
      %v727 = vunpack.c.l.b16 %v507
      %v728 = vunpack.c.h.b16 %v507
      %v729 = vunpack.c.l.b16 %v508
      %v730 = vunpack.c.l.b16 %v509
      %v731 = vunpack.c.h.b16 %v509
      %v732 = vunpack.c.l.b16 %v510
      %v733 = vpack.c.b16 %v724, %v721
      %v734 = vpack.c.b16 %v725, %v722
      %v735 = vpack.c.b16 %v726, %v723
      %v736 = vpack.c.b16 %v730, %v727
      %v737 = vpack.c.b16 %v731, %v728
      %v738 = vpack.c.b16 %v732, %v729
      %739 = vrot.lane.b32.xlu0 %v733, 110
      %v740 = vpop.permute.xlu0 %739
      %741 = vrot.lane.b32.xlu0 %v734, 110
      %v742 = vpop.permute.xlu0 %741
      %743 = vrot.lane.b32.xlu0 %v735, 110
      %v744 = vpop.permute.xlu0 %743
      %745 = vrot.lane.b32.xlu0 %v736, 110
      %v746 = vpop.permute.xlu0 %745
      %747 = vrot.lane.b32.xlu0 %v737, 110
      %v748 = vpop.permute.xlu0 %747
      %749 = vrot.lane.b32.xlu0 %v738, 110
      %v750 = vpop.permute.xlu0 %749
      %vm751 = vcmask 900096
      %v752 = vsel %vm751, %v740, %v742
      %v753 = vsel %vm751, %v742, %v744
      %v754 = vsel %vm751, %v746, %v748
      %v755 = vsel %vm751, %v748, %v750
      %v764 = vunpack.c.l.b16 %v518
      %v765 = vunpack.c.h.b16 %v518
      %v766 = vunpack.c.l.b16 %v519
      %v767 = vunpack.c.l.b16 %v520
      %v768 = vunpack.c.h.b16 %v520
      %v769 = vunpack.c.l.b16 %v521
      %v770 = vunpack.c.l.b16 %v522
      %v771 = vunpack.c.h.b16 %v522
      %v772 = vunpack.c.l.b16 %v523
      %v773 = vunpack.c.l.b16 %v524
      %v774 = vunpack.c.h.b16 %v524
      %v775 = vunpack.c.l.b16 %v525
      %v776 = vpack.c.b16 %v767, %v764
      %v777 = vpack.c.b16 %v768, %v765
      %v778 = vpack.c.b16 %v769, %v766
      %v779 = vpack.c.b16 %v773, %v770
      %v780 = vpack.c.b16 %v774, %v771
      %v781 = vpack.c.b16 %v775, %v772
      %782 = vrot.lane.b32.xlu0 %v776, 96
      %v783 = vpop.permute.xlu0 %782
      %784 = vrot.lane.b32.xlu0 %v777, 96
      %v785 = vpop.permute.xlu0 %784
      %786 = vrot.lane.b32.xlu0 %v778, 96
      %v787 = vpop.permute.xlu0 %786
      %788 = vrot.lane.b32.xlu0 %v779, 96
      %v789 = vpop.permute.xlu0 %788
      %790 = vrot.lane.b32.xlu0 %v780, 96
      %v791 = vpop.permute.xlu0 %790
      %792 = vrot.lane.b32.xlu0 %v781, 96
      %v793 = vpop.permute.xlu0 %792
      %vm794 = vcmask 785408
      %v795 = vsel %vm794, %v783, %v785
      %v796 = vsel %vm794, %v785, %v787
      %v797 = vsel %vm794, %v789, %v791
      %v798 = vsel %vm794, %v791, %v793
      %799 = vrot.lane.b32.xlu0 %v587, 95
      %v800 = vpop.permute.xlu0 %799
      %801 = vrot.lane.b32.xlu0 %v588, 95
      %v802 = vpop.permute.xlu0 %801
      %803 = vrot.lane.b32.xlu0 %v589, 95
      %v804 = vpop.permute.xlu0 %803
      %805 = vrot.lane.b32.xlu0 %v590, 95
      %v806 = vpop.permute.xlu0 %805
      %807 = vrot.lane.b32.xlu0 %v591, 95
      %v808 = vpop.permute.xlu0 %807
      %809 = vrot.lane.b32.xlu0 %v592, 95
      %v810 = vpop.permute.xlu0 %809
      %vm811 = vcmask 777216
      %v812 = vsel %vm811, %v800, %v802
      %v813 = vsel %vm811, %v802, %v804
      %v814 = vsel %vm811, %v806, %v808
      %v815 = vsel %vm811, %v808, %v810
      %v824 = vunpack.c.l.b16 %v533
      %v825 = vunpack.c.h.b16 %v533
      %v826 = vunpack.c.l.b16 %v534
      %v827 = vunpack.c.l.b16 %v535
      %v828 = vunpack.c.h.b16 %v535
      %v829 = vunpack.c.l.b16 %v536
      %v830 = vunpack.c.l.b16 %v537
      %v831 = vunpack.c.h.b16 %v537
      %v832 = vunpack.c.l.b16 %v538
      %v833 = vunpack.c.l.b16 %v539
      %v834 = vunpack.c.h.b16 %v539
      %v835 = vunpack.c.l.b16 %v540
      %v836 = vpack.c.b16 %v827, %v824
      %v837 = vpack.c.b16 %v828, %v825
      %v838 = vpack.c.b16 %v829, %v826
      %v839 = vpack.c.b16 %v833, %v830
      %v840 = vpack.c.b16 %v834, %v831
      %v841 = vpack.c.b16 %v835, %v832
      %842 = vrot.lane.b32.xlu0 %v836, 94
      %v843 = vpop.permute.xlu0 %842
      %844 = vrot.lane.b32.xlu0 %v837, 94
      %v845 = vpop.permute.xlu0 %844
      %846 = vrot.lane.b32.xlu0 %v838, 94
      %v847 = vpop.permute.xlu0 %846
      %848 = vrot.lane.b32.xlu0 %v839, 94
      %v849 = vpop.permute.xlu0 %848
      %850 = vrot.lane.b32.xlu0 %v840, 94
      %v851 = vpop.permute.xlu0 %850
      %852 = vrot.lane.b32.xlu0 %v841, 94
      %v853 = vpop.permute.xlu0 %852
      %vm854 = vcmask 769024
      %v855 = vsel %vm854, %v843, %v845
      %v856 = vsel %vm854, %v845, %v847
      %v857 = vsel %vm854, %v849, %v851
      %v858 = vsel %vm854, %v851, %v853
      %v859 = vld [vmem:[%s2] sm:$0xff]
      %v860 = vld [vmem:[%s2 + $0x8] sm:$0xf]
      %v861 = vld [vmem:[%s2 + $0xc] sm:$0xff]
      %v862 = vld [vmem:[%s2 + $0x14] sm:$0xf]
      %v863 = vld [vmem:[%s2 + $0x18] sm:$0xff]
      %v864 = vld [vmem:[%s2 + $0x20] sm:$0xf]
      %v865 = vld [vmem:[%s2 + $0x24] sm:$0xff]
      %v866 = vld [vmem:[%s2 + $0x2c] sm:$0xf]
      %v875 = vunpack.c.l.b16 %v859
      %v876 = vunpack.c.h.b16 %v859
      %v877 = vunpack.c.l.b16 %v860
      %v878 = vunpack.c.l.b16 %v861
      %v879 = vunpack.c.h.b16 %v861
      %v880 = vunpack.c.l.b16 %v862
      %v881 = vunpack.c.l.b16 %v863
      %v882 = vunpack.c.h.b16 %v863
      %v883 = vunpack.c.l.b16 %v864
      %v884 = vunpack.c.l.b16 %v865
      %v885 = vunpack.c.h.b16 %v865
      %v886 = vunpack.c.l.b16 %v866
      %v887 = vpack.c.b16 %v878, %v875
      %v888 = vpack.c.b16 %v879, %v876
      %v889 = vpack.c.b16 %v880, %v877
      %v890 = vpack.c.b16 %v884, %v881
      %v891 = vpack.c.b16 %v885, %v882
      %v892 = vpack.c.b16 %v886, %v883
      %897 = vrot.lane.b32.xlu0 %v561, 113
      %v898 = vpop.permute.xlu0 %897
      %899 = vrot.lane.b32.xlu0 %v562, 113
      %v900 = vpop.permute.xlu0 %899
      %901 = vrot.lane.b32.xlu0 %v563, 113
      %v902 = vpop.permute.xlu0 %901
      %903 = vrot.lane.b32.xlu0 %v564, 113
      %v904 = vpop.permute.xlu0 %903
      %905 = vrot.lane.b32.xlu0 %v565, 113
      %v906 = vpop.permute.xlu0 %905
      %907 = vrot.lane.b32.xlu0 %v566, 113
      %v908 = vpop.permute.xlu0 %907
      %909 = vrot.lane.b32.xlu0 %v606, 113
      %v910 = vpop.permute.xlu0 %909
      %911 = vrot.lane.b32.xlu0 %v607, 113
      %v912 = vpop.permute.xlu0 %911
      %913 = vrot.lane.b32.xlu0 %v598, 113
      %v914 = vpop.permute.xlu0 %913
      %915 = vrot.lane.b32.xlu0 %v608, 113
      %v916 = vpop.permute.xlu0 %915
      %917 = vrot.lane.b32.xlu0 %v609, 113
      %v918 = vpop.permute.xlu0 %917
      %919 = vrot.lane.b32.xlu0 %v604, 113
      %v920 = vpop.permute.xlu0 %919
      %921 = vrot.lane.b32.xlu0 %v649, 113
      %v922 = vpop.permute.xlu0 %921
      %923 = vrot.lane.b32.xlu0 %v650, 113
      %v924 = vpop.permute.xlu0 %923
      %925 = vrot.lane.b32.xlu0 %v641, 113
      %v926 = vpop.permute.xlu0 %925
      %927 = vrot.lane.b32.xlu0 %v651, 113
      %v928 = vpop.permute.xlu0 %927
      %929 = vrot.lane.b32.xlu0 %v652, 113
      %v930 = vpop.permute.xlu0 %929
      %931 = vrot.lane.b32.xlu0 %v647, 113
      %v932 = vpop.permute.xlu0 %931
      %933 = vrot.lane.b32.xlu0 %v692, 113
      %v934 = vpop.permute.xlu0 %933
      %935 = vrot.lane.b32.xlu0 %v693, 113
      %v936 = vpop.permute.xlu0 %935
      %937 = vrot.lane.b32.xlu0 %v684, 113
      %v938 = vpop.permute.xlu0 %937
      %939 = vrot.lane.b32.xlu0 %v694, 113
      %v940 = vpop.permute.xlu0 %939
      %941 = vrot.lane.b32.xlu0 %v695, 113
      %v942 = vpop.permute.xlu0 %941
      %943 = vrot.lane.b32.xlu0 %v690, 113
      %v944 = vpop.permute.xlu0 %943
      %945 = vrot.lane.b32.xlu0 %v709, 113
      %v946 = vpop.permute.xlu0 %945
      %947 = vrot.lane.b32.xlu0 %v710, 113
      %v948 = vpop.permute.xlu0 %947
      %949 = vrot.lane.b32.xlu0 %v701, 113
      %v950 = vpop.permute.xlu0 %949
      %951 = vrot.lane.b32.xlu0 %v711, 113
      %v952 = vpop.permute.xlu0 %951
      %953 = vrot.lane.b32.xlu0 %v712, 113
      %v954 = vpop.permute.xlu0 %953
      %955 = vrot.lane.b32.xlu0 %v707, 113
      %v956 = vpop.permute.xlu0 %955
      %957 = vrot.lane.b32.xlu0 %v752, 113
      %v958 = vpop.permute.xlu0 %957
      %959 = vrot.lane.b32.xlu0 %v753, 113
      %v960 = vpop.permute.xlu0 %959
      %961 = vrot.lane.b32.xlu0 %v744, 113
      %v962 = vpop.permute.xlu0 %961
      %963 = vrot.lane.b32.xlu0 %v754, 113
      %v964 = vpop.permute.xlu0 %963
      %965 = vrot.lane.b32.xlu0 %v755, 113
      %v966 = vpop.permute.xlu0 %965
      %967 = vrot.lane.b32.xlu0 %v750, 113
      %v968 = vpop.permute.xlu0 %967
      %969 = vrot.lane.b32.xlu0 %v795, 113
      %v970 = vpop.permute.xlu0 %969
      %971 = vrot.lane.b32.xlu0 %v796, 113
      %v972 = vpop.permute.xlu0 %971
      %973 = vrot.lane.b32.xlu0 %v787, 113
      %v974 = vpop.permute.xlu0 %973
      %975 = vrot.lane.b32.xlu0 %v797, 113
      %v976 = vpop.permute.xlu0 %975
      %977 = vrot.lane.b32.xlu0 %v798, 113
      %v978 = vpop.permute.xlu0 %977
      %979 = vrot.lane.b32.xlu0 %v793, 113
      %v980 = vpop.permute.xlu0 %979
      %981 = vrot.lane.b32.xlu0 %v812, 113
      %v982 = vpop.permute.xlu0 %981
      %983 = vrot.lane.b32.xlu0 %v813, 113
      %v984 = vpop.permute.xlu0 %983
      %985 = vrot.lane.b32.xlu0 %v804, 113
      %v986 = vpop.permute.xlu0 %985
      %987 = vrot.lane.b32.xlu0 %v814, 113
      %v988 = vpop.permute.xlu0 %987
      %989 = vrot.lane.b32.xlu0 %v815, 113
      %v990 = vpop.permute.xlu0 %989
      %991 = vrot.lane.b32.xlu0 %v810, 113
      %v992 = vpop.permute.xlu0 %991
      %993 = vrot.lane.b32.xlu0 %v855, 113
      %v994 = vpop.permute.xlu0 %993
      %995 = vrot.lane.b32.xlu0 %v856, 113
      %v996 = vpop.permute.xlu0 %995
      %997 = vrot.lane.b32.xlu0 %v847, 113
      %v998 = vpop.permute.xlu0 %997
      %999 = vrot.lane.b32.xlu0 %v857, 113
      %v1000 = vpop.permute.xlu0 %999
      %1001 = vrot.lane.b32.xlu0 %v858, 113
      %v1002 = vpop.permute.xlu0 %1001
      %1003 = vrot.lane.b32.xlu0 %v853, 113
      %v1004 = vpop.permute.xlu0 %1003
      %vm1005 = vcmask 924672
      %v1006 = vsel %vm1005, %v898, %v900
      %v1007 = vsel %vm1005, %v900, %v902
      %v1008 = vsel %vm1005, %v904, %v906
      %v1009 = vsel %vm1005, %v906, %v908
      %v1010 = vsel %vm1005, %v910, %v912
      %v1011 = vsel %vm1005, %v912, %v914
      %v1012 = vsel %vm1005, %v916, %v918
      %v1013 = vsel %vm1005, %v918, %v920
      %v1014 = vsel %vm1005, %v922, %v924
      %v1015 = vsel %vm1005, %v924, %v926
      %v1016 = vsel %vm1005, %v928, %v930
      %v1017 = vsel %vm1005, %v930, %v932
      %v1018 = vsel %vm1005, %v934, %v936
      %v1019 = vsel %vm1005, %v936, %v938
      %v1020 = vsel %vm1005, %v940, %v942
      %v1021 = vsel %vm1005, %v942, %v944
      %v1022 = vsel %vm1005, %v946, %v948
      %v1023 = vsel %vm1005, %v948, %v950
      %v1024 = vsel %vm1005, %v952, %v954
      %v1025 = vsel %vm1005, %v954, %v956
      %v1026 = vsel %vm1005, %v958, %v960
      %v1027 = vsel %vm1005, %v960, %v962
      %v1028 = vsel %vm1005, %v964, %v966
      %v1029 = vsel %vm1005, %v966, %v968
      %v1030 = vsel %vm1005, %v970, %v972
      %v1031 = vsel %vm1005, %v972, %v974
      %v1032 = vsel %vm1005, %v976, %v978
      %v1033 = vsel %vm1005, %v978, %v980
      %v1034 = vsel %vm1005, %v982, %v984
      %v1035 = vsel %vm1005, %v984, %v986
      %v1036 = vsel %vm1005, %v988, %v990
      %v1037 = vsel %vm1005, %v990, %v992
      %v1038 = vsel %vm1005, %v994, %v996
      %v1039 = vsel %vm1005, %v996, %v998
      %v1040 = vsel %vm1005, %v1000, %v1002
      %v1041 = vsel %vm1005, %v1002, %v1004
      %vm1078 = vcmask 261120
      %v1080 = vsel %vm1078, %v889, 0
      %v1083 = vsel %vm1078, %v892, 0
      %1085 = vmatprep.subr.bf16.mxu0 %v1021
      %1086 = vmatpush1.bf16.msra.mxu0 %v1020
      %1087 = vmatprep.subr.bf16.mxu0 %v1019
      %1088 = vmatpush1.bf16.msra.mxu0 %v1018
      %1089 = vmatprep.subr.bf16.mxu0 %v1017
      %1090 = vmatpush1.bf16.msra.mxu0 %v1016
      %1091 = vmatprep.subr.bf16.mxu0 %v1015
      %1092 = vmatpush1.bf16.msra.mxu0 %v1014
      %1093 = vmatprep.subr.bf16.mxu0 %v1013
      %1094 = vmatpush1.bf16.msra.mxu0 %v1012
      %1095 = vmatprep.subr.bf16.mxu0 %v1011
      %1096 = vmatpush1.bf16.msra.mxu0 %v1010
      %1097 = vmatprep.subr.bf16.mxu0 %v1009
      %1098 = vmatpush1.bf16.msra.mxu0 %v1008
      %1099 = vmatprep.subr.bf16.mxu0 %v1007
      %1100 = vmatpush1.bf16.msra.mxu0 %v1006
      %1101 = vmatprep.subr.bf16.mxu0 %v1037
      %1102 = vmatpush2.bf16.msra.mxu0 %v1036
      %1103 = vmatprep.subr.bf16.mxu0 %v1035
      %1104 = vmatpush2.bf16.msra.mxu0 %v1034
      %1105 = vmatprep.subr.bf16.mxu0 %v1033
      %1106 = vmatpush2.bf16.msra.mxu0 %v1032
      %1107 = vmatprep.subr.bf16.mxu0 %v1031
      %1108 = vmatpush2.bf16.msra.mxu0 %v1030
      %1109 = vmatprep.subr.bf16.mxu0 %v1029
      %1110 = vmatpush2.bf16.msra.mxu0 %v1028
      %1111 = vmatprep.subr.bf16.mxu0 %v1027
      %1112 = vmatpush2.bf16.msra.mxu0 %v1026
      %1113 = vmatprep.subr.bf16.mxu0 %v1025
      %1114 = vmatpush2.bf16.msra.mxu0 %v1024
      %1115 = vmatprep.subr.bf16.mxu0 %v1023
      %1116 = vmatpush2.bf16.msra.mxu0 %v1022
      %1117 = vmatprep.mubr.bf16.mxu0 %v888
      %1118 = vmatmul.mubr.bf16.gmra.mxu0 %v887
      %v1119 = vpop.f32.mrf.mxu0
      %v1120 = vadd.f32 0.0, %v1119
      %v1121 = vpop.f32.mrf.mxu0
      %v1122 = vadd.f32 0.0, %v1121
      %v1123 = vpop.f32.mrf.mxu0
      %v1124 = vadd.f32 0.0, %v1123
      %v1125 = vpop.f32.mrf.mxu0
      %v1126 = vadd.f32 0.0, %v1125
      %1127 = vmatprep.mubr.bf16.mxu0 %v891
      %1128 = vmatmul.mubr.bf16.gmra.mxu0 %v890
      %v1129 = vpop.f32.mrf.mxu0
      %v1130 = vadd.f32 0.0, %v1129
      %v1131 = vpop.f32.mrf.mxu0
      %v1132 = vadd.f32 0.0, %v1131
      %v1133 = vpop.f32.mrf.mxu0
      %v1134 = vadd.f32 0.0, %v1133
      %v1135 = vpop.f32.mrf.mxu0
      %v1136 = vadd.f32 0.0, %v1135
      %1137 = vdwg.mxu0
      %1138 = vmatprep.subr.bf16.mxu0 0
      %1139 = vmatpush1.bf16.msra.mxu0 0
      %1140 = vmatprep.subr.bf16.mxu0 0
      %1141 = vmatpush1.bf16.msra.mxu0 0
      %1142 = vmatprep.subr.bf16.mxu0 0
      %1143 = vmatpush1.bf16.msra.mxu0 0
      %1144 = vmatprep.subr.bf16.mxu0 0
      %1145 = vmatpush1.bf16.msra.mxu0 0
      %1146 = vmatprep.subr.bf16.mxu0 0
      %1147 = vmatpush1.bf16.msra.mxu0 0
      %1148 = vmatprep.subr.bf16.mxu0 0
      %1149 = vmatpush1.bf16.msra.mxu0 0
      %1150 = vmatprep.subr.bf16.mxu0 %v1041
      %1151 = vmatpush1.bf16.msra.mxu0 %v1040
      %1152 = vmatprep.subr.bf16.mxu0 %v1039
      %1153 = vmatpush1.bf16.msra.mxu0 %v1038
      %1154 = vmatprep.subr.bf16.mxu0 0
      %1155 = vmatpush2.bf16.msra.mxu0 0
      %1156 = vmatprep.subr.bf16.mxu0 0
      %1157 = vmatpush2.bf16.msra.mxu0 0
      %1158 = vmatprep.subr.bf16.mxu0 0
      %1159 = vmatpush2.bf16.msra.mxu0 0
      %1160 = vmatprep.subr.bf16.mxu0 0
      %1161 = vmatpush2.bf16.msra.mxu0 0
      %1162 = vmatprep.subr.bf16.mxu0 0
      %1163 = vmatpush2.bf16.msra.mxu0 0
      %1164 = vmatprep.subr.bf16.mxu0 0
      %1165 = vmatpush2.bf16.msra.mxu0 0
      %1166 = vmatprep.subr.bf16.mxu0 0
      %1167 = vmatpush2.bf16.msra.mxu0 0
      %1168 = vmatprep.subr.bf16.mxu0 0
      %1169 = vmatpush2.bf16.msra.mxu0 0
      %1170 = vmatprep.mubr.bf16.mxu0 0
      %1171 = vmatmul.mubr.bf16.gmra.mxu0 %v1080
      %v1172 = vpop.f32.mrf.mxu0
      %v1173 = vadd.f32 %v1120, %v1172
      %v1174 = vpop.f32.mrf.mxu0
      %v1175 = vadd.f32 %v1122, %v1174
      %v1176 = vpop.f32.mrf.mxu0
      %v1177 = vadd.f32 %v1124, %v1176
      %v1178 = vpop.f32.mrf.mxu0
      %v1179 = vadd.f32 %v1126, %v1178
      %1180 = vmatprep.mubr.bf16.mxu0 0
      %1181 = vmatmul.mubr.bf16.gmra.mxu0 %v1083
      %v1182 = vpop.f32.mrf.mxu0
      %v1183 = vadd.f32 %v1130, %v1182
      %v1184 = vpop.f32.mrf.mxu0
      %v1185 = vadd.f32 %v1132, %v1184
      %v1186 = vpop.f32.mrf.mxu0
      %v1187 = vadd.f32 %v1134, %v1186
      %v1188 = vpop.f32.mrf.mxu0
      %v1189 = vadd.f32 %v1136, %v1188
      %1190 = vdwg.mxu0
      %v1191 = vld [vmem:[%s3] sm:$0xff]
      %v1192 = vld [vmem:[%s3 + $0x8] sm:$0xff]
      %v1193 = vld [vmem:[%s3 + $0x10] sm:$0xff]
      %v1194 = vld [vmem:[%s3 + $0x18] sm:$0xff]
      %1196 = vset.pattern.permute.xlu0 0
      %1197 = vperm.xlu0 %1196, %v1191
      %v1198 = vpop.permute.xlu0 %1197
      %1201 = vset.pattern.permute.xlu0 0
      %1202 = vperm.xlu0 %1201, %v1192
      %v1203 = vpop.permute.xlu0 %1202
      %1206 = vset.pattern.permute.xlu0 0
      %1207 = vperm.xlu0 %1206, %v1193
      %v1208 = vpop.permute.xlu0 %1207
      %1211 = vset.pattern.permute.xlu0 0
      %1212 = vperm.xlu0 %1211, %v1194
      %v1213 = vpop.permute.xlu0 %1212
      %v1215 = vmul.f32 %v1173, %v1198
      %v1216 = vmul.f32 %v1175, %v1198
      %v1217 = vmul.f32 %v1177, %v1203
      %v1218 = vmul.f32 %v1179, %v1203
      %v1219 = vmul.f32 %v1183, %v1208
      %v1220 = vmul.f32 %v1185, %v1208
      %v1221 = vmul.f32 %v1187, %v1213
      %v1222 = vmul.f32 %v1189, %v1213
      %v1223 = vld [vmem:[%s4] sm:$0xff]
      %v1224 = vld [vmem:[%s4 + $0x8] sm:$0xff]
      %v1225 = vld [vmem:[%s4 + $0x10] sm:$0xff]
      %v1226 = vld [vmem:[%s4 + $0x18] sm:$0xff]
      %1228 = vset.pattern.permute.xlu0 0
      %1229 = vperm.xlu0 %1228, %v1223
      %v1230 = vpop.permute.xlu0 %1229
      %1233 = vset.pattern.permute.xlu0 0
      %1234 = vperm.xlu0 %1233, %v1224
      %v1235 = vpop.permute.xlu0 %1234
      %1238 = vset.pattern.permute.xlu0 0
      %1239 = vperm.xlu0 %1238, %v1225
      %v1240 = vpop.permute.xlu0 %1239
      %1243 = vset.pattern.permute.xlu0 0
      %1244 = vperm.xlu0 %1243, %v1226
      %v1245 = vpop.permute.xlu0 %1244
      %v1247 = vadd.f32 %v1215, %v1230
      %v1248 = vadd.f32 %v1216, %v1230
      %v1249 = vadd.f32 %v1217, %v1235
      %v1250 = vadd.f32 %v1218, %v1235
      %v1251 = vadd.f32 %v1219, %v1240
      %v1252 = vadd.f32 %v1220, %v1240
      %v1253 = vadd.f32 %v1221, %v1245
      %v1254 = vadd.f32 %v1222, %v1245
      %v1255 = vmax.f32 %v1247, 0.0
      %v1256 = vmax.f32 %v1248, 0.0
      %v1257 = vmax.f32 %v1249, 0.0
      %v1258 = vmax.f32 %v1250, 0.0
      %v1259 = vmax.f32 %v1251, 0.0
      %v1260 = vmax.f32 %v1252, 0.0
      %v1261 = vmax.f32 %v1253, 0.0
      %v1262 = vmax.f32 %v1254, 0.0
      %v1263 = vpack.c.bf16 %v1257, %v1255
      %v1264 = vpack.c.bf16 %v1258, %v1256
      %v1265 = vpack.c.bf16 %v1261, %v1259
      %v1266 = vpack.c.bf16 %v1262, %v1260
      %v1271 = vunpack.c.l.b16 %v1263
      %v1272 = vunpack.c.l.b16 %v1264
      %v1273 = vunpack.c.h.b16 %v1263
      %v1274 = vunpack.c.h.b16 %v1264
      %v1275 = vunpack.c.l.b16 %v1265
      %v1276 = vunpack.c.l.b16 %v1266
      %v1277 = vunpack.c.h.b16 %v1265
      %v1278 = vunpack.c.h.b16 %v1266
      %v1279 = vpack.c.b16 %v1272, %v1271
      %v1280 = vpack.c.b16 %v1274, %v1273
      %v1281 = vpack.c.b16 %v1276, %v1275
      %v1282 = vpack.c.b16 %v1278, %v1277
      %1283 = vrot.lane.b32.xlu0 %v1279, 32
      %v1284 = vpop.permute.xlu0 %1283
      %1285 = vrot.lane.b32.xlu0 %v1280, 32
      %v1286 = vpop.permute.xlu0 %1285
      %1287 = vrot.lane.b32.xlu0 %v1281, 32
      %v1288 = vpop.permute.xlu0 %1287
      %1289 = vrot.lane.b32.xlu0 %v1282, 32
      %v1290 = vpop.permute.xlu0 %1289
      %v1291 = vrot.slane %v1284, 4
      %v1292 = vrot.slane %v1286, 4
      %v1293 = vrot.slane %v1288, 4
      %v1294 = vrot.slane %v1290, 4
      %v1295 = vsel %vm358, %v1291, %v1284
      %v1296 = vsel %vm358, %v1292, %v1286
      %v1297 = vsel %vm358, %v1293, %v1288
      %v1298 = vsel %vm358, %v1294, %v1290
      %1307 = vst.msk [vmem:[#allocation2] sm:$0xff] %vm373, %v1295
      %1308 = vst.msk [vmem:[#allocation2 + $0x8] sm:$0xf] %vm308, %v1291
      %1309 = vst.msk [vmem:[#allocation2 + $0xc] sm:$0xff] %vm373, %v1296
      %1310 = vst.msk [vmem:[#allocation2 + $0x14] sm:$0xf] %vm308, %v1292
      %1311 = vst.msk [vmem:[#allocation2 + $0x18] sm:$0xff] %vm373, %v1297
      %1312 = vst.msk [vmem:[#allocation2 + $0x20] sm:$0xf] %vm308, %v1293
      %1313 = vst.msk [vmem:[#allocation2 + $0x24] sm:$0xff] %vm373, %v1298
      %1314 = vst.msk [vmem:[#allocation2 + $0x2c] sm:$0xf] %vm308, %v1294
      %v1315 = vld [vmem:[#allocation2] sm:$0xff]
      %v1316 = vld [vmem:[#allocation2 + $0x8] sm:$0xf]
      %v1317 = vld [vmem:[#allocation2 + $0xc] sm:$0xff]
      %v1318 = vld [vmem:[#allocation2 + $0x14] sm:$0xf]
      %v1319 = vld [vmem:[#allocation2 + $0x18] sm:$0xff]
      %v1320 = vld [vmem:[#allocation2 + $0x20] sm:$0xf]
      %v1321 = vld [vmem:[#allocation2 + $0x24] sm:$0xff]
      %v1322 = vld [vmem:[#allocation2 + $0x2c] sm:$0xf]
      %v1323 = vmul.bf16 %v1315, %v436
      %v1324 = vmul.bf16 %v1316, %v434
      %v1325 = vmul.bf16 %v1317, %v436
      %v1326 = vmul.bf16 %v1318, %v434
      %v1327 = vmul.bf16 %v1319, %v436
      %v1328 = vmul.bf16 %v1320, %v434
      %v1329 = vmul.bf16 %v1321, %v436
      %v1330 = vmul.bf16 %v1322, %v434
      %v1331 = vmul.bf16 %v1315, %v470
      %v1332 = vmul.bf16 %v1316, %v468
      %v1333 = vmul.bf16 %v1317, %v470
      %v1334 = vmul.bf16 %v1318, %v468
      %v1335 = vmul.bf16 %v1319, %v470
      %v1336 = vmul.bf16 %v1320, %v468
      %v1337 = vmul.bf16 %v1321, %v470
      %v1338 = vmul.bf16 %v1322, %v468
      %v1339 = vmul.bf16 %v1315, %v485
      %v1340 = vmul.bf16 %v1316, %v483
      %v1341 = vmul.bf16 %v1317, %v485
      %v1342 = vmul.bf16 %v1318, %v483
      %v1343 = vmul.bf16 %v1319, %v485
      %v1344 = vmul.bf16 %v1320, %v483
      %v1345 = vmul.bf16 %v1321, %v485
      %v1346 = vmul.bf16 %v1322, %v483
      %v1347 = vmul.bf16 %v1315, %v500
      %v1348 = vmul.bf16 %v1316, %v498
      %v1349 = vmul.bf16 %v1317, %v500
      %v1350 = vmul.bf16 %v1318, %v498
      %v1351 = vmul.bf16 %v1319, %v500
      %v1352 = vmul.bf16 %v1320, %v498
      %v1353 = vmul.bf16 %v1321, %v500
      %v1354 = vmul.bf16 %v1322, %v498
      %v1355 = vmul.bf16 %v1315, %v515
      %v1356 = vmul.bf16 %v1316, %v513
      %v1357 = vmul.bf16 %v1317, %v515
      %v1358 = vmul.bf16 %v1318, %v513
      %v1359 = vmul.bf16 %v1319, %v515
      %v1360 = vmul.bf16 %v1320, %v513
      %v1361 = vmul.bf16 %v1321, %v515
      %v1362 = vmul.bf16 %v1322, %v513
      %v1363 = vmul.bf16 %v1315, %v530
      %v1364 = vmul.bf16 %v1316, %v528
      %v1365 = vmul.bf16 %v1317, %v530
      %v1366 = vmul.bf16 %v1318, %v528
      %v1367 = vmul.bf16 %v1319, %v530
      %v1368 = vmul.bf16 %v1320, %v528
      %v1369 = vmul.bf16 %v1321, %v530
      %v1370 = vmul.bf16 %v1322, %v528
      %v1379 = vunpack.c.l.b16 %v1323
      %v1380 = vunpack.c.h.b16 %v1323
      %v1381 = vunpack.c.l.b16 %v1324
      %v1382 = vunpack.c.l.b16 %v1325
      %v1383 = vunpack.c.h.b16 %v1325
      %v1384 = vunpack.c.l.b16 %v1326
      %v1385 = vunpack.c.l.b16 %v1327
      %v1386 = vunpack.c.h.b16 %v1327
      %v1387 = vunpack.c.l.b16 %v1328
      %v1388 = vunpack.c.l.b16 %v1329
      %v1389 = vunpack.c.h.b16 %v1329
      %v1390 = vunpack.c.l.b16 %v1330
      %v1391 = vpack.c.b16 %v1382, %v1379
      %v1392 = vpack.c.b16 %v1383, %v1380
      %v1393 = vpack.c.b16 %v1384, %v1381
      %v1394 = vpack.c.b16 %v1388, %v1385
      %v1395 = vpack.c.b16 %v1389, %v1386
      %v1396 = vpack.c.b16 %v1390, %v1387
      %v1405 = vunpack.c.l.b16 %v1315
      %v1406 = vunpack.c.h.b16 %v1315
      %v1407 = vunpack.c.l.b16 %v1316
      %v1408 = vunpack.c.l.b16 %v1317
      %v1409 = vunpack.c.h.b16 %v1317
      %v1410 = vunpack.c.l.b16 %v1318
      %v1411 = vunpack.c.l.b16 %v1319
      %v1412 = vunpack.c.h.b16 %v1319
      %v1413 = vunpack.c.l.b16 %v1320
      %v1414 = vunpack.c.l.b16 %v1321
      %v1415 = vunpack.c.h.b16 %v1321
      %v1416 = vunpack.c.l.b16 %v1322
      %v1417 = vpack.c.b16 %v1408, %v1405
      %v1418 = vpack.c.b16 %v1409, %v1406
      %v1419 = vpack.c.b16 %v1410, %v1407
      %v1420 = vpack.c.b16 %v1414, %v1411
      %v1421 = vpack.c.b16 %v1415, %v1412
      %v1422 = vpack.c.b16 %v1416, %v1413
      %1423 = vrot.lane.b32.xlu0 %v1417, 127
      %v1424 = vpop.permute.xlu0 %1423
      %1425 = vrot.lane.b32.xlu0 %v1418, 127
      %v1426 = vpop.permute.xlu0 %1425
      %1427 = vrot.lane.b32.xlu0 %v1419, 127
      %v1428 = vpop.permute.xlu0 %1427
      %1429 = vrot.lane.b32.xlu0 %v1420, 127
      %v1430 = vpop.permute.xlu0 %1429
      %1431 = vrot.lane.b32.xlu0 %v1421, 127
      %v1432 = vpop.permute.xlu0 %1431
      %1433 = vrot.lane.b32.xlu0 %v1422, 127
      %v1434 = vpop.permute.xlu0 %1433
      %v1435 = vsel %vm605, %v1424, %v1426
      %v1436 = vsel %vm605, %v1426, %v1428
      %v1437 = vsel %vm605, %v1430, %v1432
      %v1438 = vsel %vm605, %v1432, %v1434
      %v1447 = vunpack.c.l.b16 %v1331
      %v1448 = vunpack.c.h.b16 %v1331
      %v1449 = vunpack.c.l.b16 %v1332
      %v1450 = vunpack.c.l.b16 %v1333
      %v1451 = vunpack.c.h.b16 %v1333
      %v1452 = vunpack.c.l.b16 %v1334
      %v1453 = vunpack.c.l.b16 %v1335
      %v1454 = vunpack.c.h.b16 %v1335
      %v1455 = vunpack.c.l.b16 %v1336
      %v1456 = vunpack.c.l.b16 %v1337
      %v1457 = vunpack.c.h.b16 %v1337
      %v1458 = vunpack.c.l.b16 %v1338
      %v1459 = vpack.c.b16 %v1450, %v1447
      %v1460 = vpack.c.b16 %v1451, %v1448
      %v1461 = vpack.c.b16 %v1452, %v1449
      %v1462 = vpack.c.b16 %v1456, %v1453
      %v1463 = vpack.c.b16 %v1457, %v1454
      %v1464 = vpack.c.b16 %v1458, %v1455
      %1465 = vrot.lane.b32.xlu0 %v1459, 126
      %v1466 = vpop.permute.xlu0 %1465
      %1467 = vrot.lane.b32.xlu0 %v1460, 126
      %v1468 = vpop.permute.xlu0 %1467
      %1469 = vrot.lane.b32.xlu0 %v1461, 126
      %v1470 = vpop.permute.xlu0 %1469
      %1471 = vrot.lane.b32.xlu0 %v1462, 126
      %v1472 = vpop.permute.xlu0 %1471
      %1473 = vrot.lane.b32.xlu0 %v1463, 126
      %v1474 = vpop.permute.xlu0 %1473
      %1475 = vrot.lane.b32.xlu0 %v1464, 126
      %v1476 = vpop.permute.xlu0 %1475
      %v1477 = vsel %vm648, %v1466, %v1468
      %v1478 = vsel %vm648, %v1468, %v1470
      %v1479 = vsel %vm648, %v1472, %v1474
      %v1480 = vsel %vm648, %v1474, %v1476
      %v1489 = vunpack.c.l.b16 %v1339
      %v1490 = vunpack.c.h.b16 %v1339
      %v1491 = vunpack.c.l.b16 %v1340
      %v1492 = vunpack.c.l.b16 %v1341
      %v1493 = vunpack.c.h.b16 %v1341
      %v1494 = vunpack.c.l.b16 %v1342
      %v1495 = vunpack.c.l.b16 %v1343
      %v1496 = vunpack.c.h.b16 %v1343
      %v1497 = vunpack.c.l.b16 %v1344
      %v1498 = vunpack.c.l.b16 %v1345
      %v1499 = vunpack.c.h.b16 %v1345
      %v1500 = vunpack.c.l.b16 %v1346
      %v1501 = vpack.c.b16 %v1492, %v1489
      %v1502 = vpack.c.b16 %v1493, %v1490
      %v1503 = vpack.c.b16 %v1494, %v1491
      %v1504 = vpack.c.b16 %v1498, %v1495
      %v1505 = vpack.c.b16 %v1499, %v1496
      %v1506 = vpack.c.b16 %v1500, %v1497
      %1507 = vrot.lane.b32.xlu0 %v1501, 112
      %v1508 = vpop.permute.xlu0 %1507
      %1509 = vrot.lane.b32.xlu0 %v1502, 112
      %v1510 = vpop.permute.xlu0 %1509
      %1511 = vrot.lane.b32.xlu0 %v1503, 112
      %v1512 = vpop.permute.xlu0 %1511
      %1513 = vrot.lane.b32.xlu0 %v1504, 112
      %v1514 = vpop.permute.xlu0 %1513
      %1515 = vrot.lane.b32.xlu0 %v1505, 112
      %v1516 = vpop.permute.xlu0 %1515
      %1517 = vrot.lane.b32.xlu0 %v1506, 112
      %v1518 = vpop.permute.xlu0 %1517
      %v1519 = vsel %vm691, %v1508, %v1510
      %v1520 = vsel %vm691, %v1510, %v1512
      %v1521 = vsel %vm691, %v1514, %v1516
      %v1522 = vsel %vm691, %v1516, %v1518
      %1523 = vrot.lane.b32.xlu0 %v1417, 111
      %v1524 = vpop.permute.xlu0 %1523
      %1525 = vrot.lane.b32.xlu0 %v1418, 111
      %v1526 = vpop.permute.xlu0 %1525
      %1527 = vrot.lane.b32.xlu0 %v1419, 111
      %v1528 = vpop.permute.xlu0 %1527
      %1529 = vrot.lane.b32.xlu0 %v1420, 111
      %v1530 = vpop.permute.xlu0 %1529
      %1531 = vrot.lane.b32.xlu0 %v1421, 111
      %v1532 = vpop.permute.xlu0 %1531
      %1533 = vrot.lane.b32.xlu0 %v1422, 111
      %v1534 = vpop.permute.xlu0 %1533
      %v1535 = vsel %vm708, %v1524, %v1526
      %v1536 = vsel %vm708, %v1526, %v1528
      %v1537 = vsel %vm708, %v1530, %v1532
      %v1538 = vsel %vm708, %v1532, %v1534
      %v1547 = vunpack.c.l.b16 %v1347
      %v1548 = vunpack.c.h.b16 %v1347
      %v1549 = vunpack.c.l.b16 %v1348
      %v1550 = vunpack.c.l.b16 %v1349
      %v1551 = vunpack.c.h.b16 %v1349
      %v1552 = vunpack.c.l.b16 %v1350
      %v1553 = vunpack.c.l.b16 %v1351
      %v1554 = vunpack.c.h.b16 %v1351
      %v1555 = vunpack.c.l.b16 %v1352
      %v1556 = vunpack.c.l.b16 %v1353
      %v1557 = vunpack.c.h.b16 %v1353
      %v1558 = vunpack.c.l.b16 %v1354
      %v1559 = vpack.c.b16 %v1550, %v1547
      %v1560 = vpack.c.b16 %v1551, %v1548
      %v1561 = vpack.c.b16 %v1552, %v1549
      %v1562 = vpack.c.b16 %v1556, %v1553
      %v1563 = vpack.c.b16 %v1557, %v1554
      %v1564 = vpack.c.b16 %v1558, %v1555
      %1565 = vrot.lane.b32.xlu0 %v1559, 110
      %v1566 = vpop.permute.xlu0 %1565
      %1567 = vrot.lane.b32.xlu0 %v1560, 110
      %v1568 = vpop.permute.xlu0 %1567
      %1569 = vrot.lane.b32.xlu0 %v1561, 110
      %v1570 = vpop.permute.xlu0 %1569
      %1571 = vrot.lane.b32.xlu0 %v1562, 110
      %v1572 = vpop.permute.xlu0 %1571
      %1573 = vrot.lane.b32.xlu0 %v1563, 110
      %v1574 = vpop.permute.xlu0 %1573
      %1575 = vrot.lane.b32.xlu0 %v1564, 110
      %v1576 = vpop.permute.xlu0 %1575
      %v1577 = vsel %vm751, %v1566, %v1568
      %v1578 = vsel %vm751, %v1568, %v1570
      %v1579 = vsel %vm751, %v1572, %v1574
      %v1580 = vsel %vm751, %v1574, %v1576
      %v1589 = vunpack.c.l.b16 %v1355
      %v1590 = vunpack.c.h.b16 %v1355
      %v1591 = vunpack.c.l.b16 %v1356
      %v1592 = vunpack.c.l.b16 %v1357
      %v1593 = vunpack.c.h.b16 %v1357
      %v1594 = vunpack.c.l.b16 %v1358
      %v1595 = vunpack.c.l.b16 %v1359
      %v1596 = vunpack.c.h.b16 %v1359
      %v1597 = vunpack.c.l.b16 %v1360
      %v1598 = vunpack.c.l.b16 %v1361
      %v1599 = vunpack.c.h.b16 %v1361
      %v1600 = vunpack.c.l.b16 %v1362
      %v1601 = vpack.c.b16 %v1592, %v1589
      %v1602 = vpack.c.b16 %v1593, %v1590
      %v1603 = vpack.c.b16 %v1594, %v1591
      %v1604 = vpack.c.b16 %v1598, %v1595
      %v1605 = vpack.c.b16 %v1599, %v1596
      %v1606 = vpack.c.b16 %v1600, %v1597
      %1607 = vrot.lane.b32.xlu0 %v1601, 96
      %v1608 = vpop.permute.xlu0 %1607
      %1609 = vrot.lane.b32.xlu0 %v1602, 96
      %v1610 = vpop.permute.xlu0 %1609
      %1611 = vrot.lane.b32.xlu0 %v1603, 96
      %v1612 = vpop.permute.xlu0 %1611
      %1613 = vrot.lane.b32.xlu0 %v1604, 96
      %v1614 = vpop.permute.xlu0 %1613
      %1615 = vrot.lane.b32.xlu0 %v1605, 96
      %v1616 = vpop.permute.xlu0 %1615
      %1617 = vrot.lane.b32.xlu0 %v1606, 96
      %v1618 = vpop.permute.xlu0 %1617
      %v1619 = vsel %vm794, %v1608, %v1610
      %v1620 = vsel %vm794, %v1610, %v1612
      %v1621 = vsel %vm794, %v1614, %v1616
      %v1622 = vsel %vm794, %v1616, %v1618
      %1623 = vrot.lane.b32.xlu0 %v1417, 95
      %v1624 = vpop.permute.xlu0 %1623
      %1625 = vrot.lane.b32.xlu0 %v1418, 95
      %v1626 = vpop.permute.xlu0 %1625
      %1627 = vrot.lane.b32.xlu0 %v1419, 95
      %v1628 = vpop.permute.xlu0 %1627
      %1629 = vrot.lane.b32.xlu0 %v1420, 95
      %v1630 = vpop.permute.xlu0 %1629
      %1631 = vrot.lane.b32.xlu0 %v1421, 95
      %v1632 = vpop.permute.xlu0 %1631
      %1633 = vrot.lane.b32.xlu0 %v1422, 95
      %v1634 = vpop.permute.xlu0 %1633
      %v1635 = vsel %vm811, %v1624, %v1626
      %v1636 = vsel %vm811, %v1626, %v1628
      %v1637 = vsel %vm811, %v1630, %v1632
      %v1638 = vsel %vm811, %v1632, %v1634
      %v1647 = vunpack.c.l.b16 %v1363
      %v1648 = vunpack.c.h.b16 %v1363
      %v1649 = vunpack.c.l.b16 %v1364
      %v1650 = vunpack.c.l.b16 %v1365
      %v1651 = vunpack.c.h.b16 %v1365
      %v1652 = vunpack.c.l.b16 %v1366
      %v1653 = vunpack.c.l.b16 %v1367
      %v1654 = vunpack.c.h.b16 %v1367
      %v1655 = vunpack.c.l.b16 %v1368
      %v1656 = vunpack.c.l.b16 %v1369
      %v1657 = vunpack.c.h.b16 %v1369
      %v1658 = vunpack.c.l.b16 %v1370
      %v1659 = vpack.c.b16 %v1650, %v1647
      %v1660 = vpack.c.b16 %v1651, %v1648
      %v1661 = vpack.c.b16 %v1652, %v1649
      %v1662 = vpack.c.b16 %v1656, %v1653
      %v1663 = vpack.c.b16 %v1657, %v1654
      %v1664 = vpack.c.b16 %v1658, %v1655
      %1665 = vrot.lane.b32.xlu0 %v1659, 94
      %v1666 = vpop.permute.xlu0 %1665
      %1667 = vrot.lane.b32.xlu0 %v1660, 94
      %v1668 = vpop.permute.xlu0 %1667
      %1669 = vrot.lane.b32.xlu0 %v1661, 94
      %v1670 = vpop.permute.xlu0 %1669
      %1671 = vrot.lane.b32.xlu0 %v1662, 94
      %v1672 = vpop.permute.xlu0 %1671
      %1673 = vrot.lane.b32.xlu0 %v1663, 94
      %v1674 = vpop.permute.xlu0 %1673
      %1675 = vrot.lane.b32.xlu0 %v1664, 94
      %v1676 = vpop.permute.xlu0 %1675
      %v1677 = vsel %vm854, %v1666, %v1668
      %v1678 = vsel %vm854, %v1668, %v1670
      %v1679 = vsel %vm854, %v1672, %v1674
      %v1680 = vsel %vm854, %v1674, %v1676
      %v1681 = vld [vmem:[%s5] sm:$0xff]
      %v1682 = vld [vmem:[%s5 + $0x8] sm:$0xf]
      %v1683 = vld [vmem:[%s5 + $0xc] sm:$0xff]
      %v1684 = vld [vmem:[%s5 + $0x14] sm:$0xf]
      %v1685 = vld [vmem:[%s5 + $0x18] sm:$0xff]
      %v1686 = vld [vmem:[%s5 + $0x20] sm:$0xf]
      %v1687 = vld [vmem:[%s5 + $0x24] sm:$0xff]
      %v1688 = vld [vmem:[%s5 + $0x2c] sm:$0xf]
      %v1697 = vunpack.c.l.b16 %v1681
      %v1698 = vunpack.c.h.b16 %v1681
      %v1699 = vunpack.c.l.b16 %v1682
      %v1700 = vunpack.c.l.b16 %v1683
      %v1701 = vunpack.c.h.b16 %v1683
      %v1702 = vunpack.c.l.b16 %v1684
      %v1703 = vunpack.c.l.b16 %v1685
      %v1704 = vunpack.c.h.b16 %v1685
      %v1705 = vunpack.c.l.b16 %v1686
      %v1706 = vunpack.c.l.b16 %v1687
      %v1707 = vunpack.c.h.b16 %v1687
      %v1708 = vunpack.c.l.b16 %v1688
      %v1709 = vpack.c.b16 %v1700, %v1697
      %v1710 = vpack.c.b16 %v1701, %v1698
      %v1711 = vpack.c.b16 %v1702, %v1699
      %v1712 = vpack.c.b16 %v1706, %v1703
      %v1713 = vpack.c.b16 %v1707, %v1704
      %v1714 = vpack.c.b16 %v1708, %v1705
      %1719 = vrot.lane.b32.xlu0 %v1391, 113
      %v1720 = vpop.permute.xlu0 %1719
      %1721 = vrot.lane.b32.xlu0 %v1392, 113
      %v1722 = vpop.permute.xlu0 %1721
      %1723 = vrot.lane.b32.xlu0 %v1393, 113
      %v1724 = vpop.permute.xlu0 %1723
      %1725 = vrot.lane.b32.xlu0 %v1394, 113
      %v1726 = vpop.permute.xlu0 %1725
      %1727 = vrot.lane.b32.xlu0 %v1395, 113
      %v1728 = vpop.permute.xlu0 %1727
      %1729 = vrot.lane.b32.xlu0 %v1396, 113
      %v1730 = vpop.permute.xlu0 %1729
      %1731 = vrot.lane.b32.xlu0 %v1435, 113
      %v1732 = vpop.permute.xlu0 %1731
      %1733 = vrot.lane.b32.xlu0 %v1436, 113
      %v1734 = vpop.permute.xlu0 %1733
      %1735 = vrot.lane.b32.xlu0 %v1428, 113
      %v1736 = vpop.permute.xlu0 %1735
      %1737 = vrot.lane.b32.xlu0 %v1437, 113
      %v1738 = vpop.permute.xlu0 %1737
      %1739 = vrot.lane.b32.xlu0 %v1438, 113
      %v1740 = vpop.permute.xlu0 %1739
      %1741 = vrot.lane.b32.xlu0 %v1434, 113
      %v1742 = vpop.permute.xlu0 %1741
      %1743 = vrot.lane.b32.xlu0 %v1477, 113
      %v1744 = vpop.permute.xlu0 %1743
      %1745 = vrot.lane.b32.xlu0 %v1478, 113
      %v1746 = vpop.permute.xlu0 %1745
      %1747 = vrot.lane.b32.xlu0 %v1470, 113
      %v1748 = vpop.permute.xlu0 %1747
      %1749 = vrot.lane.b32.xlu0 %v1479, 113
      %v1750 = vpop.permute.xlu0 %1749
      %1751 = vrot.lane.b32.xlu0 %v1480, 113
      %v1752 = vpop.permute.xlu0 %1751
      %1753 = vrot.lane.b32.xlu0 %v1476, 113
      %v1754 = vpop.permute.xlu0 %1753
      %1755 = vrot.lane.b32.xlu0 %v1519, 113
      %v1756 = vpop.permute.xlu0 %1755
      %1757 = vrot.lane.b32.xlu0 %v1520, 113
      %v1758 = vpop.permute.xlu0 %1757
      %1759 = vrot.lane.b32.xlu0 %v1512, 113
      %v1760 = vpop.permute.xlu0 %1759
      %1761 = vrot.lane.b32.xlu0 %v1521, 113
      %v1762 = vpop.permute.xlu0 %1761
      %1763 = vrot.lane.b32.xlu0 %v1522, 113
      %v1764 = vpop.permute.xlu0 %1763
      %1765 = vrot.lane.b32.xlu0 %v1518, 113
      %v1766 = vpop.permute.xlu0 %1765
      %1767 = vrot.lane.b32.xlu0 %v1535, 113
      %v1768 = vpop.permute.xlu0 %1767
      %1769 = vrot.lane.b32.xlu0 %v1536, 113
      %v1770 = vpop.permute.xlu0 %1769
      %1771 = vrot.lane.b32.xlu0 %v1528, 113
      %v1772 = vpop.permute.xlu0 %1771
      %1773 = vrot.lane.b32.xlu0 %v1537, 113
      %v1774 = vpop.permute.xlu0 %1773
      %1775 = vrot.lane.b32.xlu0 %v1538, 113
      %v1776 = vpop.permute.xlu0 %1775
      %1777 = vrot.lane.b32.xlu0 %v1534, 113
      %v1778 = vpop.permute.xlu0 %1777
      %1779 = vrot.lane.b32.xlu0 %v1577, 113
      %v1780 = vpop.permute.xlu0 %1779
      %1781 = vrot.lane.b32.xlu0 %v1578, 113
      %v1782 = vpop.permute.xlu0 %1781
      %1783 = vrot.lane.b32.xlu0 %v1570, 113
      %v1784 = vpop.permute.xlu0 %1783
      %1785 = vrot.lane.b32.xlu0 %v1579, 113
      %v1786 = vpop.permute.xlu0 %1785
      %1787 = vrot.lane.b32.xlu0 %v1580, 113
      %v1788 = vpop.permute.xlu0 %1787
      %1789 = vrot.lane.b32.xlu0 %v1576, 113
      %v1790 = vpop.permute.xlu0 %1789
      %1791 = vrot.lane.b32.xlu0 %v1619, 113
      %v1792 = vpop.permute.xlu0 %1791
      %1793 = vrot.lane.b32.xlu0 %v1620, 113
      %v1794 = vpop.permute.xlu0 %1793
      %1795 = vrot.lane.b32.xlu0 %v1612, 113
      %v1796 = vpop.permute.xlu0 %1795
      %1797 = vrot.lane.b32.xlu0 %v1621, 113
      %v1798 = vpop.permute.xlu0 %1797
      %1799 = vrot.lane.b32.xlu0 %v1622, 113
      %v1800 = vpop.permute.xlu0 %1799
      %1801 = vrot.lane.b32.xlu0 %v1618, 113
      %v1802 = vpop.permute.xlu0 %1801
      %1803 = vrot.lane.b32.xlu0 %v1635, 113
      %v1804 = vpop.permute.xlu0 %1803
      %1805 = vrot.lane.b32.xlu0 %v1636, 113
      %v1806 = vpop.permute.xlu0 %1805
      %1807 = vrot.lane.b32.xlu0 %v1628, 113
      %v1808 = vpop.permute.xlu0 %1807
      %1809 = vrot.lane.b32.xlu0 %v1637, 113
      %v1810 = vpop.permute.xlu0 %1809
      %1811 = vrot.lane.b32.xlu0 %v1638, 113
      %v1812 = vpop.permute.xlu0 %1811
      %1813 = vrot.lane.b32.xlu0 %v1634, 113
      %v1814 = vpop.permute.xlu0 %1813
      %1815 = vrot.lane.b32.xlu0 %v1677, 113
      %v1816 = vpop.permute.xlu0 %1815
      %1817 = vrot.lane.b32.xlu0 %v1678, 113
      %v1818 = vpop.permute.xlu0 %1817
      %1819 = vrot.lane.b32.xlu0 %v1670, 113
      %v1820 = vpop.permute.xlu0 %1819
      %1821 = vrot.lane.b32.xlu0 %v1679, 113
      %v1822 = vpop.permute.xlu0 %1821
      %1823 = vrot.lane.b32.xlu0 %v1680, 113
      %v1824 = vpop.permute.xlu0 %1823
      %1825 = vrot.lane.b32.xlu0 %v1676, 113
      %v1826 = vpop.permute.xlu0 %1825
      %v1827 = vsel %vm1005, %v1720, %v1722
      %v1828 = vsel %vm1005, %v1722, %v1724
      %v1829 = vsel %vm1005, %v1726, %v1728
      %v1830 = vsel %vm1005, %v1728, %v1730
      %v1831 = vsel %vm1005, %v1732, %v1734
      %v1832 = vsel %vm1005, %v1734, %v1736
      %v1833 = vsel %vm1005, %v1738, %v1740
      %v1834 = vsel %vm1005, %v1740, %v1742
      %v1835 = vsel %vm1005, %v1744, %v1746
      %v1836 = vsel %vm1005, %v1746, %v1748
      %v1837 = vsel %vm1005, %v1750, %v1752
      %v1838 = vsel %vm1005, %v1752, %v1754
      %v1839 = vsel %vm1005, %v1756, %v1758
      %v1840 = vsel %vm1005, %v1758, %v1760
      %v1841 = vsel %vm1005, %v1762, %v1764
      %v1842 = vsel %vm1005, %v1764, %v1766
      %v1843 = vsel %vm1005, %v1768, %v1770
      %v1844 = vsel %vm1005, %v1770, %v1772
      %v1845 = vsel %vm1005, %v1774, %v1776
      %v1846 = vsel %vm1005, %v1776, %v1778
      %v1847 = vsel %vm1005, %v1780, %v1782
      %v1848 = vsel %vm1005, %v1782, %v1784
      %v1849 = vsel %vm1005, %v1786, %v1788
      %v1850 = vsel %vm1005, %v1788, %v1790
      %v1851 = vsel %vm1005, %v1792, %v1794
      %v1852 = vsel %vm1005, %v1794, %v1796
      %v1853 = vsel %vm1005, %v1798, %v1800
      %v1854 = vsel %vm1005, %v1800, %v1802
      %v1855 = vsel %vm1005, %v1804, %v1806
      %v1856 = vsel %vm1005, %v1806, %v1808
      %v1857 = vsel %vm1005, %v1810, %v1812
      %v1858 = vsel %vm1005, %v1812, %v1814
      %v1859 = vsel %vm1005, %v1816, %v1818
      %v1860 = vsel %vm1005, %v1818, %v1820
      %v1861 = vsel %vm1005, %v1822, %v1824
      %v1862 = vsel %vm1005, %v1824, %v1826
      %v1900 = vsel %vm1078, %v1711, 0
      %v1903 = vsel %vm1078, %v1714, 0
      %1905 = vmatprep.subr.bf16.mxu0 %v1842
      %1906 = vmatpush1.bf16.msra.mxu0 %v1841
      %1907 = vmatprep.subr.bf16.mxu0 %v1840
      %1908 = vmatpush1.bf16.msra.mxu0 %v1839
      %1909 = vmatprep.subr.bf16.mxu0 %v1838
      %1910 = vmatpush1.bf16.msra.mxu0 %v1837
      %1911 = vmatprep.subr.bf16.mxu0 %v1836
      %1912 = vmatpush1.bf16.msra.mxu0 %v1835
      %1913 = vmatprep.subr.bf16.mxu0 %v1834
      %1914 = vmatpush1.bf16.msra.mxu0 %v1833
      %1915 = vmatprep.subr.bf16.mxu0 %v1832
      %1916 = vmatpush1.bf16.msra.mxu0 %v1831
      %1917 = vmatprep.subr.bf16.mxu0 %v1830
      %1918 = vmatpush1.bf16.msra.mxu0 %v1829
      %1919 = vmatprep.subr.bf16.mxu0 %v1828
      %1920 = vmatpush1.bf16.msra.mxu0 %v1827
      %1921 = vmatprep.subr.bf16.mxu0 %v1858
      %1922 = vmatpush2.bf16.msra.mxu0 %v1857
      %1923 = vmatprep.subr.bf16.mxu0 %v1856
      %1924 = vmatpush2.bf16.msra.mxu0 %v1855
      %1925 = vmatprep.subr.bf16.mxu0 %v1854
      %1926 = vmatpush2.bf16.msra.mxu0 %v1853
      %1927 = vmatprep.subr.bf16.mxu0 %v1852
      %1928 = vmatpush2.bf16.msra.mxu0 %v1851
      %1929 = vmatprep.subr.bf16.mxu0 %v1850
      %1930 = vmatpush2.bf16.msra.mxu0 %v1849
      %1931 = vmatprep.subr.bf16.mxu0 %v1848
      %1932 = vmatpush2.bf16.msra.mxu0 %v1847
      %1933 = vmatprep.subr.bf16.mxu0 %v1846
      %1934 = vmatpush2.bf16.msra.mxu0 %v1845
      %1935 = vmatprep.subr.bf16.mxu0 %v1844
      %1936 = vmatpush2.bf16.msra.mxu0 %v1843
      %1937 = vmatprep.mubr.bf16.mxu0 %v1710
      %1938 = vmatmul.mubr.bf16.gmra.mxu0 %v1709
      %v1939 = vpop.f32.mrf.mxu0
      %v1940 = vadd.f32 0.0, %v1939
      %v1941 = vpop.f32.mrf.mxu0
      %v1942 = vadd.f32 0.0, %v1941
      %v1943 = vpop.f32.mrf.mxu0
      %v1944 = vadd.f32 0.0, %v1943
      %v1945 = vpop.f32.mrf.mxu0
      %v1946 = vadd.f32 0.0, %v1945
      %1947 = vmatprep.mubr.bf16.mxu0 %v1713
      %1948 = vmatmul.mubr.bf16.gmra.mxu0 %v1712
      %v1949 = vpop.f32.mrf.mxu0
      %v1950 = vadd.f32 0.0, %v1949
      %v1951 = vpop.f32.mrf.mxu0
      %v1952 = vadd.f32 0.0, %v1951
      %v1953 = vpop.f32.mrf.mxu0
      %v1954 = vadd.f32 0.0, %v1953
      %v1955 = vpop.f32.mrf.mxu0
      %v1956 = vadd.f32 0.0, %v1955
      %1957 = vdwg.mxu0
      %1958 = vmatprep.subr.bf16.mxu0 0
      %1959 = vmatpush1.bf16.msra.mxu0 0
      %1960 = vmatprep.subr.bf16.mxu0 0
      %1961 = vmatpush1.bf16.msra.mxu0 0
      %1962 = vmatprep.subr.bf16.mxu0 0
      %1963 = vmatpush1.bf16.msra.mxu0 0
      %1964 = vmatprep.subr.bf16.mxu0 0
      %1965 = vmatpush1.bf16.msra.mxu0 0
      %1966 = vmatprep.subr.bf16.mxu0 0
      %1967 = vmatpush1.bf16.msra.mxu0 0
      %1968 = vmatprep.subr.bf16.mxu0 0
      %1969 = vmatpush1.bf16.msra.mxu0 0
      %1970 = vmatprep.subr.bf16.mxu0 %v1862
      %1971 = vmatpush1.bf16.msra.mxu0 %v1861
      %1972 = vmatprep.subr.bf16.mxu0 %v1860
      %1973 = vmatpush1.bf16.msra.mxu0 %v1859
      %1974 = vmatprep.subr.bf16.mxu0 0
      %1975 = vmatpush2.bf16.msra.mxu0 0
      %1976 = vmatprep.subr.bf16.mxu0 0
      %1977 = vmatpush2.bf16.msra.mxu0 0
      %1978 = vmatprep.subr.bf16.mxu0 0
      %1979 = vmatpush2.bf16.msra.mxu0 0
      %1980 = vmatprep.subr.bf16.mxu0 0
      %1981 = vmatpush2.bf16.msra.mxu0 0
      %1982 = vmatprep.subr.bf16.mxu0 0
      %1983 = vmatpush2.bf16.msra.mxu0 0
      %1984 = vmatprep.subr.bf16.mxu0 0
      %1985 = vmatpush2.bf16.msra.mxu0 0
      %1986 = vmatprep.subr.bf16.mxu0 0
      %1987 = vmatpush2.bf16.msra.mxu0 0
      %1988 = vmatprep.subr.bf16.mxu0 0
      %1989 = vmatpush2.bf16.msra.mxu0 0
      %1990 = vmatprep.mubr.bf16.mxu0 0
      %1991 = vmatmul.mubr.bf16.gmra.mxu0 %v1900
      %v1992 = vpop.f32.mrf.mxu0
      %v1993 = vadd.f32 %v1940, %v1992
      %v1994 = vpop.f32.mrf.mxu0
      %v1995 = vadd.f32 %v1942, %v1994
      %v1996 = vpop.f32.mrf.mxu0
      %v1997 = vadd.f32 %v1944, %v1996
      %v1998 = vpop.f32.mrf.mxu0
      %v1999 = vadd.f32 %v1946, %v1998
      %2000 = vmatprep.mubr.bf16.mxu0 0
      %2001 = vmatmul.mubr.bf16.gmra.mxu0 %v1903
      %v2002 = vpop.f32.mrf.mxu0
      %v2003 = vadd.f32 %v1950, %v2002
      %v2004 = vpop.f32.mrf.mxu0
      %v2005 = vadd.f32 %v1952, %v2004
      %v2006 = vpop.f32.mrf.mxu0
      %v2007 = vadd.f32 %v1954, %v2006
      %v2008 = vpop.f32.mrf.mxu0
      %v2009 = vadd.f32 %v1956, %v2008
      %2010 = vdwg.mxu0
      %v2011 = vld [vmem:[%s6] sm:$0xff]
      %v2012 = vld [vmem:[%s6 + $0x8] sm:$0xff]
      %v2013 = vld [vmem:[%s6 + $0x10] sm:$0xff]
      %v2014 = vld [vmem:[%s6 + $0x18] sm:$0xff]
      %2016 = vset.pattern.permute.xlu0 0
      %2017 = vperm.xlu0 %2016, %v2011
      %v2018 = vpop.permute.xlu0 %2017
      %2021 = vset.pattern.permute.xlu0 0
      %2022 = vperm.xlu0 %2021, %v2012
      %v2023 = vpop.permute.xlu0 %2022
      %2026 = vset.pattern.permute.xlu0 0
      %2027 = vperm.xlu0 %2026, %v2013
      %v2028 = vpop.permute.xlu0 %2027
      %2031 = vset.pattern.permute.xlu0 0
      %2032 = vperm.xlu0 %2031, %v2014
      %v2033 = vpop.permute.xlu0 %2032
      %v2035 = vmul.f32 %v1993, %v2018
      %v2036 = vmul.f32 %v1995, %v2018
      %v2037 = vmul.f32 %v1997, %v2023
      %v2038 = vmul.f32 %v1999, %v2023
      %v2039 = vmul.f32 %v2003, %v2028
      %v2040 = vmul.f32 %v2005, %v2028
      %v2041 = vmul.f32 %v2007, %v2033
      %v2042 = vmul.f32 %v2009, %v2033
      %v2043 = vld [vmem:[%s7] sm:$0xff]
      %v2044 = vld [vmem:[%s7 + $0x8] sm:$0xff]
      %v2045 = vld [vmem:[%s7 + $0x10] sm:$0xff]
      %v2046 = vld [vmem:[%s7 + $0x18] sm:$0xff]
      %2048 = vset.pattern.permute.xlu0 0
      %2049 = vperm.xlu0 %2048, %v2043
      %v2050 = vpop.permute.xlu0 %2049
      %2053 = vset.pattern.permute.xlu0 0
      %2054 = vperm.xlu0 %2053, %v2044
      %v2055 = vpop.permute.xlu0 %2054
      %2058 = vset.pattern.permute.xlu0 0
      %2059 = vperm.xlu0 %2058, %v2045
      %v2060 = vpop.permute.xlu0 %2059
      %2063 = vset.pattern.permute.xlu0 0
      %2064 = vperm.xlu0 %2063, %v2046
      %v2065 = vpop.permute.xlu0 %2064
      %v2067 = vadd.f32 %v2035, %v2050
      %v2068 = vadd.f32 %v2036, %v2050
      %v2069 = vadd.f32 %v2037, %v2055
      %v2070 = vadd.f32 %v2038, %v2055
      %v2071 = vadd.f32 %v2039, %v2060
      %v2072 = vadd.f32 %v2040, %v2060
      %v2073 = vadd.f32 %v2041, %v2065
      %v2074 = vadd.f32 %v2042, %v2065
      %v2075 = vmax.f32 %v2067, 0.0
      %v2076 = vmax.f32 %v2068, 0.0
      %v2077 = vmax.f32 %v2069, 0.0
      %v2078 = vmax.f32 %v2070, 0.0
      %v2079 = vmax.f32 %v2071, 0.0
      %v2080 = vmax.f32 %v2072, 0.0
      %v2081 = vmax.f32 %v2073, 0.0
      %v2082 = vmax.f32 %v2074, 0.0
      %v2083 = vadd.f32 %v318, %v2075
      %v2084 = vadd.f32 %v319, %v2076
      %v2085 = vadd.f32 %v320, %v2077
      %v2086 = vadd.f32 %v321, %v2078
      %v2087 = vadd.f32 %v322, %v2079
      %v2088 = vadd.f32 %v323, %v2080
      %v2089 = vadd.f32 %v324, %v2081
      %v2090 = vadd.f32 %v325, %v2082
      %2091 = vst [vmem:[%s305] sm:$0xff] %v2083
      %2092 = vst [vmem:[%s305 + $0x8] sm:$0xff] %v2084
      %2093 = vst [vmem:[%s305 + $0x10] sm:$0xff] %v2085
      %2094 = vst [vmem:[%s305 + $0x18] sm:$0xff] %v2086
      %2095 = vst [vmem:[%s305 + $0x20] sm:$0xff] %v2087
      %2096 = vst [vmem:[%s305 + $0x28] sm:$0xff] %v2088
      %2097 = vst [vmem:[%s305 + $0x30] sm:$0xff] %v2089
      %2098 = vst [vmem:[%s305 + $0x38] sm:$0xff] %v2090
      %p2099 = scmp.lt.s32.totalorder %s19, 1
      %s2100 = scalar_select %p2099, %s19, 1
      %s2101 = smul.addr %s2100, 8
      %s2102 = smul.addr %s2101, 8
      %s2103 = scalar_lea.vmem %s8, %s2102
      // Predicated region
      $region53: #{block_forward.1} parent=51 // pred_check
        %p2104 = pneg %p210
      $region54: #{block_forward.1} parent=51 // pred_check_branch
        %2106 = sbr.rel (%p2104) target = $region56
      $region55: #{block_forward.1} parent=51 // pred_region
        _
      $region56: #{block_forward.1} parent=51 // pred_fallthru
        _
    $region52: #{block_forward.1} parent=5 // pred_fallthru
      _
    %p2107 = scmp.le.s32.totalorder 2, %s14
    // Predicated region
    $region57: #{block_forward.1} parent=5 // pred_check
      %p2108 = pneg %p2107
    $region58: #{block_forward.1} parent=5 // pred_check_branch
      %2110 = sbr.rel (%p2108) target = $region60
    $region59: #{block_forward.1} parent=5 // pred_region
      %s2111 = ssub.s32 %s14, 2
      // Predicated region
      $region61: #{block_forward.1} parent=59 // pred_check
        %p2112 = pneg %p216
      $region62: #{block_forward.1} parent=59 // pred_check_branch
        %2114 = sbr.rel (%p2112) target = $region64
      $region63: #{block_forward.1} parent=59 // pred_region
        %p2115 = scmp.lt.s32.totalorder %s20, 1
        %s2116 = scalar_select %p2115, %s20, 1
        %s2117 = smul.addr %s2116, 8
        %s2118 = smul.addr %s2117, 8
        %s2119 = scalar_lea.vmem %s8, %s2118
      $region64: #{block_forward.1} parent=59 // pred_fallthru
        _
    $region60: #{block_forward.1} parent=5 // pred_fallthru
      _
  $region6: #{block_forward.1} parent=0 // loop_footer
    %s18 = sadd.s32 1, %s14
  $region7: #{block_forward.1} parent=0 // loop_footer_branch
    %13 = sbr.rel target = $region3
  $region8: #{block_forward.1} parent=0 // loop_exit
    _

</llo_original>
